<compile_context>
chip_gen: v5e
topology: v5e:2x2
jax: 0.10.0
libtpu: 0.0.40
codegen_flags: <defaults>
</compile_context>

<pallas_src>
import jax
import jax.numpy as jnp
from jax.experimental import pallas as pl
from jax.experimental.pallas import tpu as pltpu

IN_DIM = 784
HID_DIM = 400
OUT_DIM = 30
HID_PAD = 512     # hidden padded to a multiple of 128 (clean MXU / vreg tiles)
OUT_PAD = 128     # output padded to full lane width (unmasked vector stores)
TB_MAX = 1024     # batch tile cap (fits double-buffered tiles in VMEM)


def _round_up(x, m):
    return ((x + m - 1) // m) * m


def encoder_kernel(x_ref, w1_ref, b1_ref, w2_ref, b2_ref, o_ref):
    # x:  (TB, 784)  bf16     w1: (784, 512) bf16    b1: (1, 512) f32
    # w2: (512, 128) bf16     b2: (1, 128)   f32     o:  (TB, 128) f32
    x = x_ref[...]
    # fc1: bf16 MXU matmul, f32 accumulation; bias + ReLU in f32 on the VPU.
    h = jnp.dot(x, w1_ref[...], preferred_element_type=jnp.float32)
    h = jnp.maximum(h + b1_ref[...], 0.0)
    # fc2: cast the activation to bf16 for the MXU, accumulate in f32.
    z = jnp.dot(h.astype(jnp.bfloat16), w2_ref[...],
                preferred_element_type=jnp.float32)
    # sigmoid epilogue in f32 (EUP); padded lanes are sliced off by the wrapper.
    o_ref[...] = jax.nn.sigmoid(z + b2_ref[...]).astype(o_ref.dtype)


def prepare_params(w1, b1, w2, b2):
    """One-time pad + cast of the parameters.

    Weights are stored (in_features, out_features) so the kernel computes
    x @ W + b (same math as nn.Linear's x @ W.T + b). Hidden dim is padded
    400->512 and output dim 30->128; the zero pads are inert (ReLU(0)=0 and
    the corresponding rows of w2 are zero).
    """
    w1p = jnp.zeros((IN_DIM, HID_PAD), jnp.bfloat16)
    w1p = w1p.at[:, :HID_DIM].set(w1.astype(jnp.bfloat16))
    b1p = jnp.zeros((1, HID_PAD), jnp.float32)
    b1p = b1p.at[:, :HID_DIM].set(b1.reshape(1, HID_DIM).astype(jnp.float32))
    w2p = jnp.zeros((HID_PAD, OUT_PAD), jnp.bfloat16)
    w2p = w2p.at[:HID_DIM, :OUT_DIM].set(w2.astype(jnp.bfloat16))
    b2p = jnp.zeros((1, OUT_PAD), jnp.float32)
    b2p = b2p.at[:, :OUT_DIM].set(b2.reshape(1, OUT_DIM).astype(jnp.float32))
    return w1p, b1p, w2p, b2p


@jax.jit
def encoder_forward(x, w1p, b1p, w2p, b2p):
    B = x.shape[0]
    # Batch tile: multiple of 8 sublanes, capped at TB_MAX; pad B to a
    # multiple of the tile so every grid step sees a full block. Padded rows
    # are sliced off before returning (never leak into the output).
    tb = min(TB_MAX, _round_up(B, 8))
    bp = _round_up(B, tb)
    xb = x.astype(jnp.bfloat16)
    if bp != B:
        xb = jnp.pad(xb, ((0, bp - B), (0, 0)))
    n_tiles = bp // tb

    flops = 2 * B * (IN_DIM * HID_DIM + HID_DIM * OUT_DIM)
    bytes_accessed = (xb.size * 2 + w1p.size * 2 + w2p.size * 2
                      + b1p.size * 4 + b2p.size * 4 + bp * OUT_PAD * 4)

    out = pl.pallas_call(
        encoder_kernel,
        out_shape=jax.ShapeDtypeStruct((bp, OUT_PAD), jnp.float32),
        grid=(n_tiles,),
        in_specs=[
            pl.BlockSpec((tb, IN_DIM), lambda i: (i, 0)),        # x tile
            pl.BlockSpec((IN_DIM, HID_PAD), lambda i: (0, 0)),   # w1 (resident)
            pl.BlockSpec((1, HID_PAD), lambda i: (0, 0)),        # b1 (resident)
            pl.BlockSpec((HID_PAD, OUT_PAD), lambda i: (0, 0)),  # w2 (resident)
            pl.BlockSpec((1, OUT_PAD), lambda i: (0, 0)),        # b2 (resident)
        ],
        out_specs=pl.BlockSpec((tb, OUT_PAD), lambda i: (i, 0)),
        compiler_params=pltpu.CompilerParams(
            dimension_semantics=("parallel",),
        ),
        cost_estimate=pl.CostEstimate(
            flops=flops,
            transcendentals=B * OUT_DIM,
            bytes_accessed=bytes_accessed,
        ),
    )(xb, w1p, b1p, w2p, b2p)
    return out[:B, :OUT_DIM]


def init_params(key):
    """Deterministic init mimicking PyTorch nn.Linear default
    (U[-1/sqrt(fan_in), 1/sqrt(fan_in)]). Weights stored as (in, out)."""
    k1, k2, k3, k4 = jax.random.split(key, 4)
    lim1 = 1.0 / jnp.sqrt(jnp.float32(IN_DIM))
    lim2 = 1.0 / jnp.sqrt(jnp.float32(HID_DIM))
    w1 = jax.random.uniform(k1, (IN_DIM, HID_DIM), jnp.float32, -lim1, lim1)
    b1 = jax.random.uniform(k2, (HID_DIM,), jnp.float32, -lim1, lim1)
    w2 = jax.random.uniform(k3, (HID_DIM, OUT_DIM), jnp.float32, -lim2, lim2)
    b2 = jax.random.uniform(k4, (OUT_DIM,), jnp.float32, -lim2, lim2)
    return w1, b1, w2, b2


def _reference(x, w1, b1, w2, b2):
    # Plain f32 JAX reference (same math as the PyTorch forward).
    return jax.nn.sigmoid(jnp.maximum(x @ w1 + b1, 0.0) @ w2 + b2)


if __name__ == "__main__":
    key = jax.random.PRNGKey(0)
    k_params, k_x1, k_x2 = jax.random.split(key, 3)
    w1, b1, w2, b2 = init_params(k_params)
    params = prepare_params(w1, b1, w2, b2)

    # Small batch (single full tile).
    B1 = 8
    x1 = jax.random.normal(k_x1, (B1, IN_DIM), jnp.float32)
    out1 = jax.block_until_ready(encoder_forward(x1, *params))
    ref1 = _reference(x1, w1, b1, w2, b2)
    assert out1.shape == (B1, OUT_DIM)
    # bf16 MXU operands with f32 accumulation -> loosened tolerance vs f32 ref.
    assert jnp.allclose(out1, ref1, atol=2e-2, rtol=2e-2), (
        float(jnp.max(jnp.abs(out1 - ref1))))

    # Batch not a multiple of 8: exercises the pad + slice path.
    B2 = 13
    x2 = jax.random.normal(k_x2, (B2, IN_DIM), jnp.float32)
    out2 = jax.block_until_ready(encoder_forward(x2, *params))
    ref2 = _reference(x2, w1, b1, w2, b2)
    assert out2.shape == (B2, OUT_DIM)
    assert jnp.allclose(out2, ref2, atol=2e-2, rtol=2e-2), (
        float(jnp.max(jnp.abs(out2 - ref2))))

    print("KERNEL_OK")
</pallas_src>

<mosaic_0001>
module attributes {stable_mosaic.version = 11 : i64} {
  func.func @encoder_kernel(%arg0: i32, %arg1: memref<8x784xbf16, #tpu.memory_space<vmem>>, %arg2: memref<784x512xbf16, #tpu.memory_space<vmem>>, %arg3: memref<1x512xf32, #tpu.memory_space<vmem>>, %arg4: memref<512x128xbf16, #tpu.memory_space<vmem>>, %arg5: memref<1x128xf32, #tpu.memory_space<vmem>>, %arg6: memref<8x128xf32, #tpu.memory_space<vmem>>) attributes {dimension_semantics = [#tpu.dimension_semantics<parallel>], iteration_bounds = array<i64: 1>, scalar_prefetch = 0 : i64, scratch_operands = 0 : i64, tpu.core_type = #tpu.core_type<tc>, window_params = [{transform_indices = @transform_0, window_bounds = array<i64: 8, 784>}, {pipeline_mode = #tpu.pipeline_mode<synchronous>, transform_indices = @transform_1, window_bounds = array<i64: 784, 512>}, {pipeline_mode = #tpu.pipeline_mode<synchronous>, transform_indices = @transform_2, window_bounds = array<i64: 1, 512>}, {pipeline_mode = #tpu.pipeline_mode<synchronous>, transform_indices = @transform_3, window_bounds = array<i64: 512, 128>}, {pipeline_mode = #tpu.pipeline_mode<synchronous>, transform_indices = @transform_4, window_bounds = array<i64: 1, 128>}, {transform_indices = @transform_5, window_bounds = array<i64: 8, 128>}]} {
    %c0 = arith.constant 0 : index
    %c0_0 = arith.constant 0 : index
    %0 = vector.load %arg1[%c0, %c0_0] : memref<8x784xbf16, #tpu.memory_space<vmem>>, vector<8x784xbf16>
    %c0_1 = arith.constant 0 : index
    %c0_2 = arith.constant 0 : index
    %1 = vector.load %arg2[%c0_1, %c0_2] : memref<784x512xbf16, #tpu.memory_space<vmem>>, vector<784x512xbf16>
    %cst = arith.constant dense<0.000000e+00> : vector<8x512xf32>
    %2 = tpu.matmul %0, %1, %cst {dimension_numbers = #tpu.dot_dimension_numbers<[1], [0], [0], [1], [0, 0, 1, 1], [], []>} : vector<8x784xbf16>, vector<784x512xbf16>, vector<8x512xf32> -> vector<8x512xf32>
    %c0_3 = arith.constant 0 : index
    %c0_4 = arith.constant 0 : index
    %3 = vector.load %arg3[%c0_3, %c0_4] : memref<1x512xf32, #tpu.memory_space<vmem>>, vector<1x512xf32>
    %4 = vector.broadcast %3 : vector<1x512xf32> to vector<8x512xf32>
    %5 = arith.addf %2, %4 : vector<8x512xf32>
    %cst_5 = arith.constant 0.000000e+00 : f32
    %6 = vector.broadcast %cst_5 : f32 to vector<8x512xf32>
    %7 = arith.maximumf %5, %6 : vector<8x512xf32>
    %8 = arith.truncf %7 : vector<8x512xf32> to vector<8x512xbf16>
    %c0_6 = arith.constant 0 : index
    %c0_7 = arith.constant 0 : index
    %9 = vector.load %arg4[%c0_6, %c0_7] : memref<512x128xbf16, #tpu.memory_space<vmem>>, vector<512x128xbf16>
    %cst_8 = arith.constant dense<0.000000e+00> : vector<8x128xf32>
    %10 = tpu.matmul %8, %9, %cst_8 {dimension_numbers = #tpu.dot_dimension_numbers<[1], [0], [0], [1], [0, 0, 1, 1], [], []>} : vector<8x512xbf16>, vector<512x128xbf16>, vector<8x128xf32> -> vector<8x128xf32>
    %c0_9 = arith.constant 0 : index
    %c0_10 = arith.constant 0 : index
    %11 = vector.load %arg5[%c0_9, %c0_10] : memref<1x128xf32, #tpu.memory_space<vmem>>, vector<1x128xf32>
    %12 = vector.broadcast %11 : vector<1x128xf32> to vector<8x128xf32>
    %13 = arith.addf %10, %12 : vector<8x128xf32>
    %14 = arith.negf %13 : vector<8x128xf32>
    %15 = math.exp %14 : vector<8x128xf32>
    %cst_11 = arith.constant 1.000000e+00 : f32
    %16 = vector.broadcast %cst_11 : f32 to vector<8x128xf32>
    %17 = arith.addf %16, %15 : vector<8x128xf32>
    %18 = arith.divf %16, %17 : vector<8x128xf32>
    %c0_12 = arith.constant 0 : index
    %c0_13 = arith.constant 0 : index
    %19 = vector.load %arg6[%c0_12, %c0_13] : memref<8x128xf32, #tpu.memory_space<vmem>>, vector<8x128xf32>
    tpu.vector_store %arg6[%c0_12, %c0_13], %18 {strides = array<i32>} : memref<8x128xf32, #tpu.memory_space<vmem>>, vector<8x128xf32>,
    return
  }
  func.func @transform_0(%arg0: i32) -> (i32, i32) {
    %c0_i32 = arith.constant 0 : i32
    %c0_i32_0 = arith.constant 0 : i32
    return %arg0, %c0_i32 : i32, i32
  }
  func.func @transform_1(%arg0: i32) -> (i32, i32) {
    %c0_i32 = arith.constant 0 : i32
    %c0_i32_0 = arith.constant 0 : i32
    %c0_i32_1 = arith.constant 0 : i32
    return %c0_i32, %c0_i32_0 : i32, i32
  }
  func.func @transform_2(%arg0: i32) -> (i32, i32) {
    %c0_i32 = arith.constant 0 : i32
    %c0_i32_0 = arith.constant 0 : i32
    %c0_i32_1 = arith.constant 0 : i32
    return %c0_i32, %c0_i32_0 : i32, i32
  }
  func.func @transform_3(%arg0: i32) -> (i32, i32) {
    %c0_i32 = arith.constant 0 : i32
    %c0_i32_0 = arith.constant 0 : i32
    %c0_i32_1 = arith.constant 0 : i32
    return %c0_i32, %c0_i32_0 : i32, i32
  }
  func.func @transform_4(%arg0: i32) -> (i32, i32) {
    %c0_i32 = arith.constant 0 : i32
    %c0_i32_0 = arith.constant 0 : i32
    %c0_i32_1 = arith.constant 0 : i32
    return %c0_i32, %c0_i32_0 : i32, i32
  }
  func.func @transform_5(%arg0: i32) -> (i32, i32) {
    %c0_i32 = arith.constant 0 : i32
    %c0_i32_0 = arith.constant 0 : i32
    return %arg0, %c0_i32 : i32, i32
  }
}

</mosaic_0001>

<llo_original>
// kernel: encoder_forward.1
$region0: #{encoder_forward.1}
  #allocation0 [shape = 'u32[]', space=smem, size = 0x4, offset = 0x4, fixed_abs, tag = 'smem constant byte address 0x4 - core index']
  #allocation1 [shape = 'u32[72,128]{1,0:T(1,128)}', space=vmem, size = 0x9000, scoped, tag = 'internal scratch']
  %s0 = inlined_call_operand.vmem [shape: bf16[8,784], index: 0, kind: input, shape index: {}]
  %s1 = inlined_call_operand.hbm [shape: bf16[784,512], index: 1, kind: input, shape index: {}]
  %s2 = inlined_call_operand.vmem [shape: f32[1,512], index: 2, kind: input, shape index: {}]
  %s3 = inlined_call_operand.hbm [shape: bf16[512,128], index: 3, kind: input, shape index: {}]
  %s4 = inlined_call_operand.vmem [shape: f32[1,128], index: 4, kind: input, shape index: {}]
  %s5 = inlined_call_operand.hbm [shape: f32[8,128], index: 5, kind: output, shape index: {}]
  %s6 = sld [smem:[#allocation0]]
  $region38: #{encoder_forward.1} parent=0
    _
  %s8 = ssub.s32 1, %s6
  %s9 = scalar_select 0, %s8, %s6
  $region1: #{encoder_forward.1} parent=0
    #allocation2 [shape = 'u8[802816]{0}', space=vmem, size = 0xc4000, scoped, tag = 'input window, operand 1, single buffered']
    #allocation3 [shape = 's32[1]{0}', space=sflag, size = 0x4, scoped, tag = 'scoped memory for encoder_forward.1']
    #allocation4 [shape = 's32[1]{0}', space=sflag, size = 0x4, scoped, tag = 'scoped memory for encoder_forward.1']
    #allocation5 [shape = 'u8[131072]{0}', space=vmem, size = 0x20000, scoped, tag = 'input window, operand 3, single buffered']
    #allocation6 [shape = 's32[1]{0}', space=sflag, size = 0x4, scoped, tag = 'scoped memory for encoder_forward.1']
    #allocation7 [shape = 'u8[4096]{0}', space=vmem, size = 0x1000, scoped, tag = 'output window, operand 0, single buffered']
    %10 = vsyncpa [#allocation3], 0
    %11 = vsyncpa [#allocation6], 0
    %12 = vsyncpa [#allocation4], 0
    // Predicated region
    $region2: #{encoder_forward.1} parent=1 // pred_check
      _
    $region3: #{encoder_forward.1} parent=1 // pred_check_branch
      %14 = sbr.rel (0) target = $region5
    $region4: #{encoder_forward.1} parent=1 // pred_region
      _
    $region5: #{encoder_forward.1} parent=1 // pred_fallthru
      _
    // Predicated region
    $region6: #{encoder_forward.1} parent=1 // pred_check
      _
    $region7: #{encoder_forward.1} parent=1 // pred_check_branch
      %16 = sbr.rel (0) target = $region9
    $region8: #{encoder_forward.1} parent=1 // pred_region
      %18 = vsyncadd [#allocation3], 0
      %s19 = sshll.u32 %s1, 4
      %s20 = int_to_ptr.hbm [resolvable:$true] %s19
      %s21 = sshll.u32 [#allocation2], 4
      %s22 = int_to_ptr.vmem [resolvable:$true] %s21
      %27 = dma.hbm_to_vmem [thread:$0]  %s20, 25088, %s22, [#allocation3], 256, 256, 16
    $region9: #{encoder_forward.1} parent=1 // pred_fallthru
      _
    // Predicated region
    $region10: #{encoder_forward.1} parent=1 // pred_check
      _
    $region11: #{encoder_forward.1} parent=1 // pred_check_branch
      %29 = sbr.rel (0) target = $region13
    $region12: #{encoder_forward.1} parent=1 // pred_region
      _
    $region13: #{encoder_forward.1} parent=1 // pred_fallthru
      _
    // Predicated region
    $region14: #{encoder_forward.1} parent=1 // pred_check
      _
    $region15: #{encoder_forward.1} parent=1 // pred_check_branch
      %31 = sbr.rel (0) target = $region17
    $region16: #{encoder_forward.1} parent=1 // pred_region
      %33 = vsyncadd [#allocation6], 0
      %s34 = sshll.u32 %s3, 4
      %s35 = int_to_ptr.hbm [resolvable:$true] %s34
      %s36 = sshll.u32 [#allocation5], 4
      %s37 = int_to_ptr.vmem [resolvable:$true] %s36
      %42 = dma.hbm_to_vmem [thread:$0]  %s35, 4096, %s37, [#allocation6], 64, 64, 4
    $region17: #{encoder_forward.1} parent=1 // pred_fallthru
      _
    // Predicated region
    $region18: #{encoder_forward.1} parent=1 // pred_check
      _
    $region19: #{encoder_forward.1} parent=1 // pred_check_branch
      %44 = sbr.rel (0) target = $region21
    $region20: #{encoder_forward.1} parent=1 // pred_region
      _
    $region21: #{encoder_forward.1} parent=1 // pred_fallthru
      _
    // Predicated region
    $region22: #{encoder_forward.1} parent=1 // pred_check
      _
    $region23: #{encoder_forward.1} parent=1 // pred_check_branch
      %46 = sbr.rel (0) target = $region25
    $region24: #{encoder_forward.1} parent=1 // pred_region
      %48 = dma.done [#allocation3], 25088
    $region25: #{encoder_forward.1} parent=1 // pred_fallthru
      _
    // Predicated region
    $region26: #{encoder_forward.1} parent=1 // pred_check
      _
    $region27: #{encoder_forward.1} parent=1 // pred_check_branch
      %50 = sbr.rel (0) target = $region29
    $region28: #{encoder_forward.1} parent=1 // pred_region
      %52 = dma.done [#allocation6], 4096
    $region29: #{encoder_forward.1} parent=1 // pred_fallthru
      _
    %v54 = vld [vmem:[%s0] sm:$0xff]
    %v55 = vld [vmem:[%s0 + $0x8] sm:$0xff]
    %v56 = vld [vmem:[%s0 + $0x10] sm:$0xff]
    %v57 = vld [vmem:[%s0 + $0x18] sm:$0xf]
    %v58 = vld [vmem:[#allocation2] sm:$0xff]
    %v59 = vld [vmem:[#allocation2 + $0x8] sm:$0xff]
    %v60 = vld [vmem:[#allocation2 + $0x10] sm:$0xff]
    %v61 = vld [vmem:[#allocation2 + $0x18] sm:$0xff]
    %v62 = vld [vmem:[#allocation2 + $0x20] sm:$0xff]
    %v63 = vld [vmem:[#allocation2 + $0x28] sm:$0xff]
    %v64 = vld [vmem:[#allocation2 + $0x30] sm:$0xff]
    %v65 = vld [vmem:[#allocation2 + $0x38] sm:$0xff]
    %v66 = vld [vmem:[#allocation2 + $0x40] sm:$0xff]
    %v67 = vld [vmem:[#allocation2 + $0x48] sm:$0xff]
    %v68 = vld [vmem:[#allocation2 + $0x50] sm:$0xff]
    %v69 = vld [vmem:[#allocation2 + $0x58] sm:$0xff]
    %v70 = vld [vmem:[#allocation2 + $0x60] sm:$0xff]
    %v71 = vld [vmem:[#allocation2 + $0x68] sm:$0xff]
    %v72 = vld [vmem:[#allocation2 + $0x70] sm:$0xff]
    %v73 = vld [vmem:[#allocation2 + $0x78] sm:$0xff]
    %v74 = vld [vmem:[#allocation2 + $0x80] sm:$0xff]
    %v75 = vld [vmem:[#allocation2 + $0x88] sm:$0xff]
    %v76 = vld [vmem:[#allocation2 + $0x90] sm:$0xff]
    %v77 = vld [vmem:[#allocation2 + $0x98] sm:$0xff]
    %v78 = vld [vmem:[#allocation2 + $0xa0] sm:$0xff]
    %v79 = vld [vmem:[#allocation2 + $0xa8] sm:$0xff]
    %v80 = vld [vmem:[#allocation2 + $0xb0] sm:$0xff]
    %v81 = vld [vmem:[#allocation2 + $0xb8] sm:$0xff]
    %v82 = vld [vmem:[#allocation2 + $0xc0] sm:$0xff]
    %v83 = vld [vmem:[#allocation2 + $0xc8] sm:$0xff]
    %v84 = vld [vmem:[#allocation2 + $0xd0] sm:$0xff]
    %v85 = vld [vmem:[#allocation2 + $0xd8] sm:$0xff]
    %v86 = vld [vmem:[#allocation2 + $0xe0] sm:$0xff]
    %v87 = vld [vmem:[#allocation2 + $0xe8] sm:$0xff]
    %v88 = vld [vmem:[#allocation2 + $0xf0] sm:$0xff]
    %v89 = vld [vmem:[#allocation2 + $0xf8] sm:$0xff]
    %v90 = vld [vmem:[#allocation2 + $0x100] sm:$0xff]
    %v91 = vld [vmem:[#allocation2 + $0x108] sm:$0xff]
    %v92 = vld [vmem:[#allocation2 + $0x110] sm:$0xff]
    %v93 = vld [vmem:[#allocation2 + $0x118] sm:$0xff]
    %v94 = vld [vmem:[#allocation2 + $0x120] sm:$0xff]
    %v95 = vld [vmem:[#allocation2 + $0x128] sm:$0xff]
    %v96 = vld [vmem:[#allocation2 + $0x130] sm:$0xff]
    %v97 = vld [vmem:[#allocation2 + $0x138] sm:$0xff]
    %v98 = vld [vmem:[#allocation2 + $0x140] sm:$0xff]
    %v99 = vld [vmem:[#allocation2 + $0x148] sm:$0xff]
    %v100 = vld [vmem:[#allocation2 + $0x150] sm:$0xff]
    %v101 = vld [vmem:[#allocation2 + $0x158] sm:$0xff]
    %v102 = vld [vmem:[#allocation2 + $0x160] sm:$0xff]
    %v103 = vld [vmem:[#allocation2 + $0x168] sm:$0xff]
    %v104 = vld [vmem:[#allocation2 + $0x170] sm:$0xff]
    %v105 = vld [vmem:[#allocation2 + $0x178] sm:$0xff]
    %v106 = vld [vmem:[#allocation2 + $0x180] sm:$0xff]
    %v107 = vld [vmem:[#allocation2 + $0x188] sm:$0xff]
    %v108 = vld [vmem:[#allocation2 + $0x190] sm:$0xff]
    %v109 = vld [vmem:[#allocation2 + $0x198] sm:$0xff]
    %v110 = vld [vmem:[#allocation2 + $0x1a0] sm:$0xff]
    %v111 = vld [vmem:[#allocation2 + $0x1a8] sm:$0xff]
    %v112 = vld [vmem:[#allocation2 + $0x1b0] sm:$0xff]
    %v113 = vld [vmem:[#allocation2 + $0x1b8] sm:$0xff]
    %v114 = vld [vmem:[#allocation2 + $0x1c0] sm:$0xff]
    %v115 = vld [vmem:[#allocation2 + $0x1c8] sm:$0xff]
    %v116 = vld [vmem:[#allocation2 + $0x1d0] sm:$0xff]
    %v117 = vld [vmem:[#allocation2 + $0x1d8] sm:$0xff]
    %v118 = vld [vmem:[#allocation2 + $0x1e0] sm:$0xff]
    %v119 = vld [vmem:[#allocation2 + $0x1e8] sm:$0xff]
    %v120 = vld [vmem:[#allocation2 + $0x1f0] sm:$0xff]
    %v121 = vld [vmem:[#allocation2 + $0x1f8] sm:$0xff]
    %v122 = vld [vmem:[#allocation2 + $0x200] sm:$0xff]
    %v123 = vld [vmem:[#allocation2 + $0x208] sm:$0xff]
    %v124 = vld [vmem:[#allocation2 + $0x210] sm:$0xff]
    %v125 = vld [vmem:[#allocation2 + $0x218] sm:$0xff]
    %v126 = vld [vmem:[#allocation2 + $0x220] sm:$0xff]
    %v127 = vld [vmem:[#allocation2 + $0x228] sm:$0xff]
    %v128 = vld [vmem:[#allocation2 + $0x230] sm:$0xff]
    %v129 = vld [vmem:[#allocation2 + $0x238] sm:$0xff]
    %v130 = vld [vmem:[#allocation2 + $0x240] sm:$0xff]
    %v131 = vld [vmem:[#allocation2 + $0x248] sm:$0xff]
    %v132 = vld [vmem:[#allocation2 + $0x250] sm:$0xff]
    %v133 = vld [vmem:[#allocation2 + $0x258] sm:$0xff]
    %v134 = vld [vmem:[#allocation2 + $0x260] sm:$0xff]
    %v135 = vld [vmem:[#allocation2 + $0x268] sm:$0xff]
    %v136 = vld [vmem:[#allocation2 + $0x270] sm:$0xff]
    %v137 = vld [vmem:[#allocation2 + $0x278] sm:$0xff]
    %v138 = vld [vmem:[#allocation2 + $0x280] sm:$0xff]
    %v139 = vld [vmem:[#allocation2 + $0x288] sm:$0xff]
    %v140 = vld [vmem:[#allocation2 + $0x290] sm:$0xff]
    %v141 = vld [vmem:[#allocation2 + $0x298] sm:$0xff]
    %v142 = vld [vmem:[#allocation2 + $0x2a0] sm:$0xff]
    %v143 = vld [vmem:[#allocation2 + $0x2a8] sm:$0xff]
    %v144 = vld [vmem:[#allocation2 + $0x2b0] sm:$0xff]
    %v145 = vld [vmem:[#allocation2 + $0x2b8] sm:$0xff]
    %v146 = vld [vmem:[#allocation2 + $0x2c0] sm:$0xff]
    %v147 = vld [vmem:[#allocation2 + $0x2c8] sm:$0xff]
    %v148 = vld [vmem:[#allocation2 + $0x2d0] sm:$0xff]
    %v149 = vld [vmem:[#allocation2 + $0x2d8] sm:$0xff]
    %v150 = vld [vmem:[#allocation2 + $0x2e0] sm:$0xff]
    %v151 = vld [vmem:[#allocation2 + $0x2e8] sm:$0xff]
    %v152 = vld [vmem:[#allocation2 + $0x2f0] sm:$0xff]
    %v153 = vld [vmem:[#allocation2 + $0x2f8] sm:$0xff]
    %v154 = vld [vmem:[#allocation2 + $0x300] sm:$0xff]
    %v155 = vld [vmem:[#allocation2 + $0x308] sm:$0xff]
    %v156 = vld [vmem:[#allocation2 + $0x310] sm:$0xff]
    %v157 = vld [vmem:[#allocation2 + $0x318] sm:$0xff]
    %v158 = vld [vmem:[#allocation2 + $0x320] sm:$0xff]
    %v159 = vld [vmem:[#allocation2 + $0x328] sm:$0xff]
    %v160 = vld [vmem:[#allocation2 + $0x330] sm:$0xff]
    %v161 = vld [vmem:[#allocation2 + $0x338] sm:$0xff]
    %v162 = vld [vmem:[#allocation2 + $0x340] sm:$0xff]
    %v163 = vld [vmem:[#allocation2 + $0x348] sm:$0xff]
    %v164 = vld [vmem:[#allocation2 + $0x350] sm:$0xff]
    %v165 = vld [vmem:[#allocation2 + $0x358] sm:$0xff]
    %v166 = vld [vmem:[#allocation2 + $0x360] sm:$0xff]
    %v167 = vld [vmem:[#allocation2 + $0x368] sm:$0xff]
    %v168 = vld [vmem:[#allocation2 + $0x370] sm:$0xff]
    %v169 = vld [vmem:[#allocation2 + $0x378] sm:$0xff]
    %v170 = vld [vmem:[#allocation2 + $0x380] sm:$0xff]
    %v171 = vld [vmem:[#allocation2 + $0x388] sm:$0xff]
    %v172 = vld [vmem:[#allocation2 + $0x390] sm:$0xff]
    %v173 = vld [vmem:[#allocation2 + $0x398] sm:$0xff]
    %v174 = vld [vmem:[#allocation2 + $0x3a0] sm:$0xff]
    %v175 = vld [vmem:[#allocation2 + $0x3a8] sm:$0xff]
    %v176 = vld [vmem:[#allocation2 + $0x3b0] sm:$0xff]
    %v177 = vld [vmem:[#allocation2 + $0x3b8] sm:$0xff]
    %v178 = vld [vmem:[#allocation2 + $0x3c0] sm:$0xff]
    %v179 = vld [vmem:[#allocation2 + $0x3c8] sm:$0xff]
    %v180 = vld [vmem:[#allocation2 + $0x3d0] sm:$0xff]
    %v181 = vld [vmem:[#allocation2 + $0x3d8] sm:$0xff]
    %v182 = vld [vmem:[#allocation2 + $0x3e0] sm:$0xff]
    %v183 = vld [vmem:[#allocation2 + $0x3e8] sm:$0xff]
    %v184 = vld [vmem:[#allocation2 + $0x3f0] sm:$0xff]
    %v185 = vld [vmem:[#allocation2 + $0x3f8] sm:$0xff]
    %v186 = vld [vmem:[#allocation2 + $0x400] sm:$0xff]
    %v187 = vld [vmem:[#allocation2 + $0x408] sm:$0xff]
    %v188 = vld [vmem:[#allocation2 + $0x410] sm:$0xff]
    %v189 = vld [vmem:[#allocation2 + $0x418] sm:$0xff]
    %v190 = vld [vmem:[#allocation2 + $0x420] sm:$0xff]
    %v191 = vld [vmem:[#allocation2 + $0x428] sm:$0xff]
    %v192 = vld [vmem:[#allocation2 + $0x430] sm:$0xff]
    %v193 = vld [vmem:[#allocation2 + $0x438] sm:$0xff]
    %v194 = vld [vmem:[#allocation2 + $0x440] sm:$0xff]
    %v195 = vld [vmem:[#allocation2 + $0x448] sm:$0xff]
    %v196 = vld [vmem:[#allocation2 + $0x450] sm:$0xff]
    %v197 = vld [vmem:[#allocation2 + $0x458] sm:$0xff]
    %v198 = vld [vmem:[#allocation2 + $0x460] sm:$0xff]
    %v199 = vld [vmem:[#allocation2 + $0x468] sm:$0xff]
    %v200 = vld [vmem:[#allocation2 + $0x470] sm:$0xff]
    %v201 = vld [vmem:[#allocation2 + $0x478] sm:$0xff]
    %v202 = vld [vmem:[#allocation2 + $0x480] sm:$0xff]
    %v203 = vld [vmem:[#allocation2 + $0x488] sm:$0xff]
    %v204 = vld [vmem:[#allocation2 + $0x490] sm:$0xff]
    %v205 = vld [vmem:[#allocation2 + $0x498] sm:$0xff]
    %v206 = vld [vmem:[#allocation2 + $0x4a0] sm:$0xff]
    %v207 = vld [vmem:[#allocation2 + $0x4a8] sm:$0xff]
    %v208 = vld [vmem:[#allocation2 + $0x4b0] sm:$0xff]
    %v209 = vld [vmem:[#allocation2 + $0x4b8] sm:$0xff]
    %v210 = vld [vmem:[#allocation2 + $0x4c0] sm:$0xff]
    %v211 = vld [vmem:[#allocation2 + $0x4c8] sm:$0xff]
    %v212 = vld [vmem:[#allocation2 + $0x4d0] sm:$0xff]
    %v213 = vld [vmem:[#allocation2 + $0x4d8] sm:$0xff]
    %v214 = vld [vmem:[#allocation2 + $0x4e0] sm:$0xff]
    %v215 = vld [vmem:[#allocation2 + $0x4e8] sm:$0xff]
    %v216 = vld [vmem:[#allocation2 + $0x4f0] sm:$0xff]
    %v217 = vld [vmem:[#allocation2 + $0x4f8] sm:$0xff]
    %v218 = vld [vmem:[#allocation2 + $0x500] sm:$0xff]
    %v219 = vld [vmem:[#allocation2 + $0x508] sm:$0xff]
    %v220 = vld [vmem:[#allocation2 + $0x510] sm:$0xff]
    %v221 = vld [vmem:[#allocation2 + $0x518] sm:$0xff]
    %v222 = vld [vmem:[#allocation2 + $0x520] sm:$0xff]
    %v223 = vld [vmem:[#allocation2 + $0x528] sm:$0xff]
    %v224 = vld [vmem:[#allocation2 + $0x530] sm:$0xff]
    %v225 = vld [vmem:[#allocation2 + $0x538] sm:$0xff]
    %v226 = vld [vmem:[#allocation2 + $0x540] sm:$0xff]
    %v227 = vld [vmem:[#allocation2 + $0x548] sm:$0xff]
    %v228 = vld [vmem:[#allocation2 + $0x550] sm:$0xff]
    %v229 = vld [vmem:[#allocation2 + $0x558] sm:$0xff]
    %v230 = vld [vmem:[#allocation2 + $0x560] sm:$0xff]
    %v231 = vld [vmem:[#allocation2 + $0x568] sm:$0xff]
    %v232 = vld [vmem:[#allocation2 + $0x570] sm:$0xff]
    %v233 = vld [vmem:[#allocation2 + $0x578] sm:$0xff]
    %v234 = vld [vmem:[#allocation2 + $0x580] sm:$0xff]
    %v235 = vld [vmem:[#allocation2 + $0x588] sm:$0xff]
    %v236 = vld [vmem:[#allocation2 + $0x590] sm:$0xff]
    %v237 = vld [vmem:[#allocation2 + $0x598] sm:$0xff]
    %v238 = vld [vmem:[#allocation2 + $0x5a0] sm:$0xff]
    %v239 = vld [vmem:[#allocation2 + $0x5a8] sm:$0xff]
    %v240 = vld [vmem:[#allocation2 + $0x5b0] sm:$0xff]
    %v241 = vld [vmem:[#allocation2 + $0x5b8] sm:$0xff]
    %v242 = vld [vmem:[#allocation2 + $0x5c0] sm:$0xff]
    %v243 = vld [vmem:[#allocation2 + $0x5c8] sm:$0xff]
    %v244 = vld [vmem:[#allocation2 + $0x5d0] sm:$0xff]
    %v245 = vld [vmem:[#allocation2 + $0x5d8] sm:$0xff]
    %v246 = vld [vmem:[#allocation2 + $0x5e0] sm:$0xff]
    %v247 = vld [vmem:[#allocation2 + $0x5e8] sm:$0xff]
    %v248 = vld [vmem:[#allocation2 + $0x5f0] sm:$0xff]
    %v249 = vld [vmem:[#allocation2 + $0x5f8] sm:$0xff]
    %v250 = vld [vmem:[#allocation2 + $0x600] sm:$0xff]
    %v251 = vld [vmem:[#allocation2 + $0x608] sm:$0xff]
    %v252 = vld [vmem:[#allocation2 + $0x610] sm:$0xff]
    %v253 = vld [vmem:[#allocation2 + $0x618] sm:$0xff]
    %v254 = vld [vmem:[%s2] sm:$0xf]
    %v256 = vperm.slane %v254, 0
    %v257 = vperm.slane %v254, 1
    %v258 = vperm.slane %v254, 2
    %v259 = vperm.slane %v254, 3
    %v268 = vunpack.c.l.b16 %v54
    %v269 = vunpack.c.h.b16 %v54
    %v270 = vunpack.c.l.b16 %v55
    %v271 = vunpack.c.h.b16 %v55
    %v272 = vunpack.c.l.b16 %v56
    %v273 = vunpack.c.h.b16 %v56
    %v274 = vunpack.c.l.b16 %v57
    %v275 = vpack.c.b16 %v268, %v268
    %v276 = vpack.c.b16 %v269, %v269
    %v277 = vpack.c.b16 %v270, %v270
    %v278 = vpack.c.b16 %v271, %v271
    %v279 = vpack.c.b16 %v272, %v272
    %v280 = vpack.c.b16 %v273, %v273
    %v281 = vpack.c.b16 %v274, %v274
    %v484 = vunpack.c.l.b16 %v58
    %v485 = vunpack.c.h.b16 %v58
    %v486 = vunpack.c.l.b16 %v59
    %v487 = vunpack.c.h.b16 %v59
    %v488 = vunpack.c.l.b16 %v60
    %v489 = vunpack.c.h.b16 %v60
    %v490 = vunpack.c.l.b16 %v61
    %v491 = vunpack.c.h.b16 %v61
    %v492 = vunpack.c.l.b16 %v62
    %v493 = vunpack.c.h.b16 %v62
    %v494 = vunpack.c.l.b16 %v63
    %v495 = vunpack.c.h.b16 %v63
    %v496 = vunpack.c.l.b16 %v64
    %v497 = vunpack.c.h.b16 %v64
    %v498 = vunpack.c.l.b16 %v65
    %v499 = vunpack.c.h.b16 %v65
    %v500 = vunpack.c.l.b16 %v66
    %v501 = vunpack.c.h.b16 %v66
    %v502 = vunpack.c.l.b16 %v67
    %v503 = vunpack.c.h.b16 %v67
    %v504 = vunpack.c.l.b16 %v68
    %v505 = vunpack.c.h.b16 %v68
    %v506 = vunpack.c.l.b16 %v69
    %v507 = vunpack.c.h.b16 %v69
    %v508 = vunpack.c.l.b16 %v70
    %v509 = vunpack.c.h.b16 %v70
    %v510 = vunpack.c.l.b16 %v71
    %v511 = vunpack.c.h.b16 %v71
    %v512 = vunpack.c.l.b16 %v72
    %v513 = vunpack.c.h.b16 %v72
    %v514 = vunpack.c.l.b16 %v73
    %v515 = vunpack.c.h.b16 %v73
    %v516 = vunpack.c.l.b16 %v74
    %v517 = vunpack.c.h.b16 %v74
    %v518 = vunpack.c.l.b16 %v75
    %v519 = vunpack.c.h.b16 %v75
    %v520 = vunpack.c.l.b16 %v76
    %v521 = vunpack.c.h.b16 %v76
    %v522 = vunpack.c.l.b16 %v77
    %v523 = vunpack.c.h.b16 %v77
    %v524 = vunpack.c.l.b16 %v78
    %v525 = vunpack.c.h.b16 %v78
    %v526 = vunpack.c.l.b16 %v79
    %v527 = vunpack.c.h.b16 %v79
    %v528 = vunpack.c.l.b16 %v80
    %v529 = vunpack.c.h.b16 %v80
    %v530 = vunpack.c.l.b16 %v81
    %v531 = vunpack.c.h.b16 %v81
    %v532 = vunpack.c.l.b16 %v82
    %v533 = vunpack.c.h.b16 %v82
    %v534 = vunpack.c.l.b16 %v83
    %v535 = vunpack.c.h.b16 %v83
    %v536 = vunpack.c.l.b16 %v84
    %v537 = vunpack.c.h.b16 %v84
    %v538 = vunpack.c.l.b16 %v85
    %v539 = vunpack.c.h.b16 %v85
    %v540 = vunpack.c.l.b16 %v86
    %v541 = vunpack.c.h.b16 %v86
    %v542 = vunpack.c.l.b16 %v87
    %v543 = vunpack.c.h.b16 %v87
    %v544 = vunpack.c.l.b16 %v88
    %v545 = vunpack.c.h.b16 %v88
    %v546 = vunpack.c.l.b16 %v89
    %v547 = vunpack.c.h.b16 %v89
    %v548 = vunpack.c.l.b16 %v90
    %v549 = vunpack.c.h.b16 %v90
    %v550 = vunpack.c.l.b16 %v91
    %v551 = vunpack.c.h.b16 %v91
    %v552 = vunpack.c.l.b16 %v92
    %v553 = vunpack.c.h.b16 %v92
    %v554 = vunpack.c.l.b16 %v93
    %v555 = vunpack.c.h.b16 %v93
    %v556 = vunpack.c.l.b16 %v94
    %v557 = vunpack.c.h.b16 %v94
    %v558 = vunpack.c.l.b16 %v95
    %v559 = vunpack.c.h.b16 %v95
    %v560 = vunpack.c.l.b16 %v96
    %v561 = vunpack.c.h.b16 %v96
    %v562 = vunpack.c.l.b16 %v97
    %v563 = vunpack.c.h.b16 %v97
    %v564 = vunpack.c.l.b16 %v98
    %v565 = vunpack.c.h.b16 %v98
    %v566 = vunpack.c.l.b16 %v99
    %v567 = vunpack.c.h.b16 %v99
    %v568 = vunpack.c.l.b16 %v100
    %v569 = vunpack.c.h.b16 %v100
    %v570 = vunpack.c.l.b16 %v101
    %v571 = vunpack.c.h.b16 %v101
    %v572 = vunpack.c.l.b16 %v102
    %v573 = vunpack.c.h.b16 %v102
    %v574 = vunpack.c.l.b16 %v103
    %v575 = vunpack.c.h.b16 %v103
    %v576 = vunpack.c.l.b16 %v104
    %v577 = vunpack.c.h.b16 %v104
    %v578 = vunpack.c.l.b16 %v105
    %v579 = vunpack.c.h.b16 %v105
    %v580 = vunpack.c.l.b16 %v106
    %v581 = vunpack.c.h.b16 %v106
    %v582 = vunpack.c.l.b16 %v107
    %v583 = vunpack.c.h.b16 %v107
    %v584 = vunpack.c.l.b16 %v108
    %v585 = vunpack.c.h.b16 %v108
    %v586 = vunpack.c.l.b16 %v109
    %v587 = vunpack.c.h.b16 %v109
    %v588 = vunpack.c.l.b16 %v110
    %v589 = vunpack.c.h.b16 %v110
    %v590 = vunpack.c.l.b16 %v111
    %v591 = vunpack.c.h.b16 %v111
    %v592 = vunpack.c.l.b16 %v112
    %v593 = vunpack.c.h.b16 %v112
    %v594 = vunpack.c.l.b16 %v113
    %v595 = vunpack.c.h.b16 %v113
    %v596 = vunpack.c.l.b16 %v114
    %v597 = vunpack.c.h.b16 %v114
    %v598 = vunpack.c.l.b16 %v115
    %v599 = vunpack.c.h.b16 %v115
    %v600 = vunpack.c.l.b16 %v116
    %v601 = vunpack.c.h.b16 %v116
    %v602 = vunpack.c.l.b16 %v117
    %v603 = vunpack.c.h.b16 %v117
    %v604 = vunpack.c.l.b16 %v118
    %v605 = vunpack.c.h.b16 %v118
    %v606 = vunpack.c.l.b16 %v119
    %v607 = vunpack.c.h.b16 %v119
    %v608 = vunpack.c.l.b16 %v120
    %v609 = vunpack.c.h.b16 %v120
    %v610 = vunpack.c.l.b16 %v121
    %v611 = vunpack.c.h.b16 %v121
    %v612 = vunpack.c.l.b16 %v122
    %v613 = vunpack.c.h.b16 %v122
    %v614 = vunpack.c.l.b16 %v123
    %v615 = vunpack.c.h.b16 %v123
    %v616 = vunpack.c.l.b16 %v124
    %v617 = vunpack.c.h.b16 %v124
    %v618 = vunpack.c.l.b16 %v125
    %v619 = vunpack.c.h.b16 %v125
    %v620 = vunpack.c.l.b16 %v126
    %v621 = vunpack.c.h.b16 %v126
    %v622 = vunpack.c.l.b16 %v127
    %v623 = vunpack.c.h.b16 %v127
    %v624 = vunpack.c.l.b16 %v128
    %v625 = vunpack.c.h.b16 %v128
    %v626 = vunpack.c.l.b16 %v129
    %v627 = vunpack.c.h.b16 %v129
    %v628 = vunpack.c.l.b16 %v130
    %v629 = vunpack.c.h.b16 %v130
    %v630 = vunpack.c.l.b16 %v131
    %v631 = vunpack.c.h.b16 %v131
    %v632 = vunpack.c.l.b16 %v132
    %v633 = vunpack.c.h.b16 %v132
    %v634 = vunpack.c.l.b16 %v133
    %v635 = vunpack.c.h.b16 %v133
    %v636 = vunpack.c.l.b16 %v134
    %v637 = vunpack.c.h.b16 %v134
    %v638 = vunpack.c.l.b16 %v135
    %v639 = vunpack.c.h.b16 %v135
    %v640 = vunpack.c.l.b16 %v136
    %v641 = vunpack.c.h.b16 %v136
    %v642 = vunpack.c.l.b16 %v137
    %v643 = vunpack.c.h.b16 %v137
    %v644 = vunpack.c.l.b16 %v138
    %v645 = vunpack.c.h.b16 %v138
    %v646 = vunpack.c.l.b16 %v139
    %v647 = vunpack.c.h.b16 %v139
    %v648 = vunpack.c.l.b16 %v140
    %v649 = vunpack.c.h.b16 %v140
    %v650 = vunpack.c.l.b16 %v141
    %v651 = vunpack.c.h.b16 %v141
    %v652 = vunpack.c.l.b16 %v142
    %v653 = vunpack.c.h.b16 %v142
    %v654 = vunpack.c.l.b16 %v143
    %v655 = vunpack.c.h.b16 %v143
    %v656 = vunpack.c.l.b16 %v144
    %v657 = vunpack.c.h.b16 %v144
    %v658 = vunpack.c.l.b16 %v145
    %v659 = vunpack.c.h.b16 %v145
    %v660 = vunpack.c.l.b16 %v146
    %v661 = vunpack.c.h.b16 %v146
    %v662 = vunpack.c.l.b16 %v147
    %v663 = vunpack.c.h.b16 %v147
    %v664 = vunpack.c.l.b16 %v148
    %v665 = vunpack.c.h.b16 %v148
    %v666 = vunpack.c.l.b16 %v149
    %v667 = vunpack.c.h.b16 %v149
    %v668 = vunpack.c.l.b16 %v150
    %v669 = vunpack.c.h.b16 %v150
    %v670 = vunpack.c.l.b16 %v151
    %v671 = vunpack.c.h.b16 %v151
    %v672 = vunpack.c.l.b16 %v152
    %v673 = vunpack.c.h.b16 %v152
    %v674 = vunpack.c.l.b16 %v153
    %v675 = vunpack.c.h.b16 %v153
    %v676 = vunpack.c.l.b16 %v154
    %v677 = vunpack.c.h.b16 %v154
    %v678 = vunpack.c.l.b16 %v155
    %v679 = vunpack.c.h.b16 %v155
    %v680 = vunpack.c.l.b16 %v156
    %v681 = vunpack.c.h.b16 %v156
    %v682 = vunpack.c.l.b16 %v157
    %v683 = vunpack.c.h.b16 %v157
    %v684 = vunpack.c.l.b16 %v158
    %v685 = vunpack.c.h.b16 %v158
    %v686 = vunpack.c.l.b16 %v159
    %v687 = vunpack.c.h.b16 %v159
    %v688 = vunpack.c.l.b16 %v160
    %v689 = vunpack.c.h.b16 %v160
    %v690 = vunpack.c.l.b16 %v161
    %v691 = vunpack.c.h.b16 %v161
    %v692 = vunpack.c.l.b16 %v162
    %v693 = vunpack.c.h.b16 %v162
    %v694 = vunpack.c.l.b16 %v163
    %v695 = vunpack.c.h.b16 %v163
    %v696 = vunpack.c.l.b16 %v164
    %v697 = vunpack.c.h.b16 %v164
    %v698 = vunpack.c.l.b16 %v165
    %v699 = vunpack.c.h.b16 %v165
    %v700 = vunpack.c.l.b16 %v166
    %v701 = vunpack.c.h.b16 %v166
    %v702 = vunpack.c.l.b16 %v167
    %v703 = vunpack.c.h.b16 %v167
    %v704 = vunpack.c.l.b16 %v168
    %v705 = vunpack.c.h.b16 %v168
    %v706 = vunpack.c.l.b16 %v169
    %v707 = vunpack.c.h.b16 %v169
    %v708 = vunpack.c.l.b16 %v170
    %v709 = vunpack.c.h.b16 %v170
    %v710 = vunpack.c.l.b16 %v171
    %v711 = vunpack.c.h.b16 %v171
    %v712 = vunpack.c.l.b16 %v172
    %v713 = vunpack.c.h.b16 %v172
    %v714 = vunpack.c.l.b16 %v173
    %v715 = vunpack.c.h.b16 %v173
    %v716 = vunpack.c.l.b16 %v174
    %v717 = vunpack.c.h.b16 %v174
    %v718 = vunpack.c.l.b16 %v175
    %v719 = vunpack.c.h.b16 %v175
    %v720 = vunpack.c.l.b16 %v176
    %v721 = vunpack.c.h.b16 %v176
    %v722 = vunpack.c.l.b16 %v177
    %v723 = vunpack.c.h.b16 %v177
    %v724 = vunpack.c.l.b16 %v178
    %v725 = vunpack.c.h.b16 %v178
    %v726 = vunpack.c.l.b16 %v179
    %v727 = vunpack.c.h.b16 %v179
    %v728 = vunpack.c.l.b16 %v180
    %v729 = vunpack.c.h.b16 %v180
    %v730 = vunpack.c.l.b16 %v181
    %v731 = vunpack.c.h.b16 %v181
    %v732 = vunpack.c.l.b16 %v182
    %v733 = vunpack.c.h.b16 %v182
    %v734 = vunpack.c.l.b16 %v183
    %v735 = vunpack.c.h.b16 %v183
    %v736 = vunpack.c.l.b16 %v184
    %v737 = vunpack.c.h.b16 %v184
    %v738 = vunpack.c.l.b16 %v185
    %v739 = vunpack.c.h.b16 %v185
    %v740 = vunpack.c.l.b16 %v186
    %v741 = vunpack.c.h.b16 %v186
    %v742 = vunpack.c.l.b16 %v187
    %v743 = vunpack.c.h.b16 %v187
    %v744 = vunpack.c.l.b16 %v188
    %v745 = vunpack.c.h.b16 %v188
    %v746 = vunpack.c.l.b16 %v189
    %v747 = vunpack.c.h.b16 %v189
    %v748 = vunpack.c.l.b16 %v190
    %v749 = vunpack.c.h.b16 %v190
    %v750 = vunpack.c.l.b16 %v191
    %v751 = vunpack.c.h.b16 %v191
    %v752 = vunpack.c.l.b16 %v192
    %v753 = vunpack.c.h.b16 %v192
    %v754 = vunpack.c.l.b16 %v193
    %v755 = vunpack.c.h.b16 %v193
    %v756 = vunpack.c.l.b16 %v194
    %v757 = vunpack.c.h.b16 %v194
    %v758 = vunpack.c.l.b16 %v195
    %v759 = vunpack.c.h.b16 %v195
    %v760 = vunpack.c.l.b16 %v196
    %v761 = vunpack.c.h.b16 %v196
    %v762 = vunpack.c.l.b16 %v197
    %v763 = vunpack.c.h.b16 %v197
    %v764 = vunpack.c.l.b16 %v198
    %v765 = vunpack.c.h.b16 %v198
    %v766 = vunpack.c.l.b16 %v199
    %v767 = vunpack.c.h.b16 %v199
    %v768 = vunpack.c.l.b16 %v200
    %v769 = vunpack.c.h.b16 %v200
    %v770 = vunpack.c.l.b16 %v201
    %v771 = vunpack.c.h.b16 %v201
    %v772 = vunpack.c.l.b16 %v202
    %v773 = vunpack.c.h.b16 %v202
    %v774 = vunpack.c.l.b16 %v203
    %v775 = vunpack.c.h.b16 %v203
    %v776 = vunpack.c.l.b16 %v204
    %v777 = vunpack.c.h.b16 %v204
    %v778 = vunpack.c.l.b16 %v205
    %v779 = vunpack.c.h.b16 %v205
    %v780 = vunpack.c.l.b16 %v206
    %v781 = vunpack.c.h.b16 %v206
    %v782 = vunpack.c.l.b16 %v207
    %v783 = vunpack.c.h.b16 %v207
    %v784 = vunpack.c.l.b16 %v208
    %v785 = vunpack.c.h.b16 %v208
    %v786 = vunpack.c.l.b16 %v209
    %v787 = vunpack.c.h.b16 %v209
    %v788 = vunpack.c.l.b16 %v210
    %v789 = vunpack.c.h.b16 %v210
    %v790 = vunpack.c.l.b16 %v211
    %v791 = vunpack.c.h.b16 %v211
    %v792 = vunpack.c.l.b16 %v212
    %v793 = vunpack.c.h.b16 %v212
    %v794 = vunpack.c.l.b16 %v213
    %v795 = vunpack.c.h.b16 %v213
    %v796 = vunpack.c.l.b16 %v214
    %v797 = vunpack.c.h.b16 %v214
    %v798 = vunpack.c.l.b16 %v215
    %v799 = vunpack.c.h.b16 %v215
    %v800 = vunpack.c.l.b16 %v216
    %v801 = vunpack.c.h.b16 %v216
    %v802 = vunpack.c.l.b16 %v217
    %v803 = vunpack.c.h.b16 %v217
    %v804 = vunpack.c.l.b16 %v218
    %v805 = vunpack.c.h.b16 %v218
    %v806 = vunpack.c.l.b16 %v219
    %v807 = vunpack.c.h.b16 %v219
    %v808 = vunpack.c.l.b16 %v220
    %v809 = vunpack.c.h.b16 %v220
    %v810 = vunpack.c.l.b16 %v221
    %v811 = vunpack.c.h.b16 %v221
    %v812 = vunpack.c.l.b16 %v222
    %v813 = vunpack.c.h.b16 %v222
    %v814 = vunpack.c.l.b16 %v223
    %v815 = vunpack.c.h.b16 %v223
    %v816 = vunpack.c.l.b16 %v224
    %v817 = vunpack.c.h.b16 %v224
    %v818 = vunpack.c.l.b16 %v225
    %v819 = vunpack.c.h.b16 %v225
    %v820 = vunpack.c.l.b16 %v226
    %v821 = vunpack.c.h.b16 %v226
    %v822 = vunpack.c.l.b16 %v227
    %v823 = vunpack.c.h.b16 %v227
    %v824 = vunpack.c.l.b16 %v228
    %v825 = vunpack.c.h.b16 %v228
    %v826 = vunpack.c.l.b16 %v229
    %v827 = vunpack.c.h.b16 %v229
    %v828 = vunpack.c.l.b16 %v230
    %v829 = vunpack.c.h.b16 %v230
    %v830 = vunpack.c.l.b16 %v231
    %v831 = vunpack.c.h.b16 %v231
    %v832 = vunpack.c.l.b16 %v232
    %v833 = vunpack.c.h.b16 %v232
    %v834 = vunpack.c.l.b16 %v233
    %v835 = vunpack.c.h.b16 %v233
    %v836 = vunpack.c.l.b16 %v234
    %v837 = vunpack.c.h.b16 %v234
    %v838 = vunpack.c.l.b16 %v235
    %v839 = vunpack.c.h.b16 %v235
    %v840 = vunpack.c.l.b16 %v236
    %v841 = vunpack.c.h.b16 %v236
    %v842 = vunpack.c.l.b16 %v237
    %v843 = vunpack.c.h.b16 %v237
    %v844 = vunpack.c.l.b16 %v238
    %v845 = vunpack.c.h.b16 %v238
    %v846 = vunpack.c.l.b16 %v239
    %v847 = vunpack.c.h.b16 %v239
    %v848 = vunpack.c.l.b16 %v240
    %v849 = vunpack.c.h.b16 %v240
    %v850 = vunpack.c.l.b16 %v241
    %v851 = vunpack.c.h.b16 %v241
    %v852 = vunpack.c.l.b16 %v242
    %v853 = vunpack.c.h.b16 %v242
    %v854 = vunpack.c.l.b16 %v243
    %v855 = vunpack.c.h.b16 %v243
    %v856 = vunpack.c.l.b16 %v244
    %v857 = vunpack.c.h.b16 %v244
    %v858 = vunpack.c.l.b16 %v245
    %v859 = vunpack.c.h.b16 %v245
    %v860 = vunpack.c.l.b16 %v246
    %v861 = vunpack.c.h.b16 %v246
    %v862 = vunpack.c.l.b16 %v247
    %v863 = vunpack.c.h.b16 %v247
    %v864 = vunpack.c.l.b16 %v248
    %v865 = vunpack.c.h.b16 %v248
    %v866 = vunpack.c.l.b16 %v249
    %v867 = vunpack.c.h.b16 %v249
    %v868 = vunpack.c.l.b16 %v250
    %v869 = vunpack.c.h.b16 %v250
    %v870 = vunpack.c.l.b16 %v251
    %v871 = vunpack.c.h.b16 %v251
    %v872 = vunpack.c.l.b16 %v252
    %v873 = vunpack.c.h.b16 %v252
    %v874 = vunpack.c.l.b16 %v253
    %v875 = vunpack.c.h.b16 %v253
    %v876 = vpack.c.b16 %v488, %v484
    %v877 = vpack.c.b16 %v489, %v485
    %v878 = vpack.c.b16 %v490, %v486
    %v879 = vpack.c.b16 %v491, %v487
    %v880 = vpack.c.b16 %v496, %v492
    %v881 = vpack.c.b16 %v497, %v493
    %v882 = vpack.c.b16 %v498, %v494
    %v883 = vpack.c.b16 %v499, %v495
    %v884 = vpack.c.b16 %v504, %v500
    %v885 = vpack.c.b16 %v505, %v501
    %v886 = vpack.c.b16 %v506, %v502
    %v887 = vpack.c.b16 %v507, %v503
    %v888 = vpack.c.b16 %v512, %v508
    %v889 = vpack.c.b16 %v513, %v509
    %v890 = vpack.c.b16 %v514, %v510
    %v891 = vpack.c.b16 %v515, %v511
    %v892 = vpack.c.b16 %v520, %v516
    %v893 = vpack.c.b16 %v521, %v517
    %v894 = vpack.c.b16 %v522, %v518
    %v895 = vpack.c.b16 %v523, %v519
    %v896 = vpack.c.b16 %v528, %v524
    %v897 = vpack.c.b16 %v529, %v525
    %v898 = vpack.c.b16 %v530, %v526
    %v899 = vpack.c.b16 %v531, %v527
    %v900 = vpack.c.b16 %v536, %v532
    %v901 = vpack.c.b16 %v537, %v533
    %v902 = vpack.c.b16 %v538, %v534
    %v903 = vpack.c.b16 %v539, %v535
    %v904 = vpack.c.b16 %v544, %v540
    %v905 = vpack.c.b16 %v545, %v541
    %v906 = vpack.c.b16 %v546, %v542
    %v907 = vpack.c.b16 %v547, %v543
    %v908 = vpack.c.b16 %v552, %v548
    %v909 = vpack.c.b16 %v553, %v549
    %v910 = vpack.c.b16 %v554, %v550
    %v911 = vpack.c.b16 %v555, %v551
    %v912 = vpack.c.b16 %v560, %v556
    %v913 = vpack.c.b16 %v561, %v557
    %v914 = vpack.c.b16 %v562, %v558
    %v915 = vpack.c.b16 %v563, %v559
    %v916 = vpack.c.b16 %v568, %v564
    %v917 = vpack.c.b16 %v569, %v565
    %v918 = vpack.c.b16 %v570, %v566
    %v919 = vpack.c.b16 %v571, %v567
    %v920 = vpack.c.b16 %v576, %v572
    %v921 = vpack.c.b16 %v577, %v573
    %v922 = vpack.c.b16 %v578, %v574
    %v923 = vpack.c.b16 %v579, %v575
    %v924 = vpack.c.b16 %v584, %v580
    %v925 = vpack.c.b16 %v585, %v581
    %v926 = vpack.c.b16 %v586, %v582
    %v927 = vpack.c.b16 %v587, %v583
    %v928 = vpack.c.b16 %v592, %v588
    %v929 = vpack.c.b16 %v593, %v589
    %v930 = vpack.c.b16 %v594, %v590
    %v931 = vpack.c.b16 %v595, %v591
    %v932 = vpack.c.b16 %v600, %v596
    %v933 = vpack.c.b16 %v601, %v597
    %v934 = vpack.c.b16 %v602, %v598
    %v935 = vpack.c.b16 %v603, %v599
    %v936 = vpack.c.b16 %v608, %v604
    %v937 = vpack.c.b16 %v609, %v605
    %v938 = vpack.c.b16 %v610, %v606
    %v939 = vpack.c.b16 %v611, %v607
    %v940 = vpack.c.b16 %v616, %v612
    %v941 = vpack.c.b16 %v617, %v613
    %v942 = vpack.c.b16 %v618, %v614
    %v943 = vpack.c.b16 %v619, %v615
    %v944 = vpack.c.b16 %v624, %v620
    %v945 = vpack.c.b16 %v625, %v621
    %v946 = vpack.c.b16 %v626, %v622
    %v947 = vpack.c.b16 %v627, %v623
    %v948 = vpack.c.b16 %v632, %v628
    %v949 = vpack.c.b16 %v633, %v629
    %v950 = vpack.c.b16 %v634, %v630
    %v951 = vpack.c.b16 %v635, %v631
    %v952 = vpack.c.b16 %v640, %v636
    %v953 = vpack.c.b16 %v641, %v637
    %v954 = vpack.c.b16 %v642, %v638
    %v955 = vpack.c.b16 %v643, %v639
    %v956 = vpack.c.b16 %v648, %v644
    %v957 = vpack.c.b16 %v649, %v645
    %v958 = vpack.c.b16 %v650, %v646
    %v959 = vpack.c.b16 %v651, %v647
    %v960 = vpack.c.b16 %v656, %v652
    %v961 = vpack.c.b16 %v657, %v653
    %v962 = vpack.c.b16 %v658, %v654
    %v963 = vpack.c.b16 %v659, %v655
    %v964 = vpack.c.b16 %v664, %v660
    %v965 = vpack.c.b16 %v665, %v661
    %v966 = vpack.c.b16 %v666, %v662
    %v967 = vpack.c.b16 %v667, %v663
    %v968 = vpack.c.b16 %v672, %v668
    %v969 = vpack.c.b16 %v673, %v669
    %v970 = vpack.c.b16 %v674, %v670
    %v971 = vpack.c.b16 %v675, %v671
    %v972 = vpack.c.b16 %v680, %v676
    %v973 = vpack.c.b16 %v681, %v677
    %v974 = vpack.c.b16 %v682, %v678
    %v975 = vpack.c.b16 %v683, %v679
    %v976 = vpack.c.b16 %v688, %v684
    %v977 = vpack.c.b16 %v689, %v685
    %v978 = vpack.c.b16 %v690, %v686
    %v979 = vpack.c.b16 %v691, %v687
    %v980 = vpack.c.b16 %v696, %v692
    %v981 = vpack.c.b16 %v697, %v693
    %v982 = vpack.c.b16 %v698, %v694
    %v983 = vpack.c.b16 %v699, %v695
    %v984 = vpack.c.b16 %v704, %v700
    %v985 = vpack.c.b16 %v705, %v701
    %v986 = vpack.c.b16 %v706, %v702
    %v987 = vpack.c.b16 %v707, %v703
    %v988 = vpack.c.b16 %v712, %v708
    %v989 = vpack.c.b16 %v713, %v709
    %v990 = vpack.c.b16 %v714, %v710
    %v991 = vpack.c.b16 %v715, %v711
    %v992 = vpack.c.b16 %v720, %v716
    %v993 = vpack.c.b16 %v721, %v717
    %v994 = vpack.c.b16 %v722, %v718
    %v995 = vpack.c.b16 %v723, %v719
    %v996 = vpack.c.b16 %v728, %v724
    %v997 = vpack.c.b16 %v729, %v725
    %v998 = vpack.c.b16 %v730, %v726
    %v999 = vpack.c.b16 %v731, %v727
    %v1000 = vpack.c.b16 %v736, %v732
    %v1001 = vpack.c.b16 %v737, %v733
    %v1002 = vpack.c.b16 %v738, %v734
    %v1003 = vpack.c.b16 %v739, %v735
    %v1004 = vpack.c.b16 %v744, %v740
    %v1005 = vpack.c.b16 %v745, %v741
    %v1006 = vpack.c.b16 %v746, %v742
    %v1007 = vpack.c.b16 %v747, %v743
    %v1008 = vpack.c.b16 %v752, %v748
    %v1009 = vpack.c.b16 %v753, %v749
    %v1010 = vpack.c.b16 %v754, %v750
    %v1011 = vpack.c.b16 %v755, %v751
    %v1012 = vpack.c.b16 %v760, %v756
    %v1013 = vpack.c.b16 %v761, %v757
    %v1014 = vpack.c.b16 %v762, %v758
    %v1015 = vpack.c.b16 %v763, %v759
    %v1016 = vpack.c.b16 %v768, %v764
    %v1017 = vpack.c.b16 %v769, %v765
    %v1018 = vpack.c.b16 %v770, %v766
    %v1019 = vpack.c.b16 %v771, %v767
    %v1020 = vpack.c.b16 %v776, %v772
    %v1021 = vpack.c.b16 %v777, %v773
    %v1022 = vpack.c.b16 %v778, %v774
    %v1023 = vpack.c.b16 %v779, %v775
    %v1024 = vpack.c.b16 %v784, %v780
    %v1025 = vpack.c.b16 %v785, %v781
    %v1026 = vpack.c.b16 %v786, %v782
    %v1027 = vpack.c.b16 %v787, %v783
    %v1028 = vpack.c.b16 %v792, %v788
    %v1029 = vpack.c.b16 %v793, %v789
    %v1030 = vpack.c.b16 %v794, %v790
    %v1031 = vpack.c.b16 %v795, %v791
    %v1032 = vpack.c.b16 %v800, %v796
    %v1033 = vpack.c.b16 %v801, %v797
    %v1034 = vpack.c.b16 %v802, %v798
    %v1035 = vpack.c.b16 %v803, %v799
    %v1036 = vpack.c.b16 %v808, %v804
    %v1037 = vpack.c.b16 %v809, %v805
    %v1038 = vpack.c.b16 %v810, %v806
    %v1039 = vpack.c.b16 %v811, %v807
    %v1040 = vpack.c.b16 %v816, %v812
    %v1041 = vpack.c.b16 %v817, %v813
    %v1042 = vpack.c.b16 %v818, %v814
    %v1043 = vpack.c.b16 %v819, %v815
    %v1044 = vpack.c.b16 %v824, %v820
    %v1045 = vpack.c.b16 %v825, %v821
    %v1046 = vpack.c.b16 %v826, %v822
    %v1047 = vpack.c.b16 %v827, %v823
    %v1048 = vpack.c.b16 %v832, %v828
    %v1049 = vpack.c.b16 %v833, %v829
    %v1050 = vpack.c.b16 %v834, %v830
    %v1051 = vpack.c.b16 %v835, %v831
    %v1052 = vpack.c.b16 %v840, %v836
    %v1053 = vpack.c.b16 %v841, %v837
    %v1054 = vpack.c.b16 %v842, %v838
    %v1055 = vpack.c.b16 %v843, %v839
    %v1056 = vpack.c.b16 %v848, %v844
    %v1057 = vpack.c.b16 %v849, %v845
    %v1058 = vpack.c.b16 %v850, %v846
    %v1059 = vpack.c.b16 %v851, %v847
    %v1060 = vpack.c.b16 %v856, %v852
    %v1061 = vpack.c.b16 %v857, %v853
    %v1062 = vpack.c.b16 %v858, %v854
    %v1063 = vpack.c.b16 %v859, %v855
    %v1064 = vpack.c.b16 %v864, %v860
    %v1065 = vpack.c.b16 %v865, %v861
    %v1066 = vpack.c.b16 %v866, %v862
    %v1067 = vpack.c.b16 %v867, %v863
    %v1068 = vpack.c.b16 %v872, %v868
    %v1069 = vpack.c.b16 %v873, %v869
    %v1070 = vpack.c.b16 %v874, %v870
    %v1071 = vpack.c.b16 %v875, %v871
    %vm1268 = vcmask 130048
    %v1270 = vsel %vm1268, %v281, 0
    %1272 = vmatpush.bf16.msra.mxu0 %v904
    %1273 = vmatpush.bf16.msra.mxu0 %v900
    %1274 = vmatpush.bf16.msra.mxu0 %v896
    %1275 = vmatpush.bf16.msra.mxu0 %v892
    %1276 = vmatpush.bf16.msra.mxu0 %v888
    %1277 = vmatpush.bf16.msra.mxu0 %v884
    %1278 = vmatpush.bf16.msra.mxu0 %v880
    %1279 = vmatpush.bf16.msra.mxu0 %v876
    %1280 = vmatmul.bf16.gmra.mxu0 %v275
    %v1281 = vpop.f32.mrf.mxu0
    %v1282 = vadd.f32 %v256, %v1281
    %v1283 = vpop.f32.mrf.mxu0
    %1284 = vdwg.mxu0
    %1285 = vmatpush.bf16.msra.mxu0 %v936
    %1286 = vmatpush.bf16.msra.mxu0 %v932
    %1287 = vmatpush.bf16.msra.mxu0 %v928
    %1288 = vmatpush.bf16.msra.mxu0 %v924
    %1289 = vmatpush.bf16.msra.mxu0 %v920
    %1290 = vmatpush.bf16.msra.mxu0 %v916
    %1291 = vmatpush.bf16.msra.mxu0 %v912
    %1292 = vmatpush.bf16.msra.mxu0 %v908
    %1293 = vmatmul.bf16.gmra.mxu0 %v276
    %v1294 = vpop.f32.mrf.mxu0
    %v1295 = vadd.f32 %v1282, %v1294
    %v1296 = vpop.f32.mrf.mxu0
    %1297 = vdwg.mxu0
    %1298 = vmatpush.bf16.msra.mxu0 %v968
    %1299 = vmatpush.bf16.msra.mxu0 %v964
    %1300 = vmatpush.bf16.msra.mxu0 %v960
    %1301 = vmatpush.bf16.msra.mxu0 %v956
    %1302 = vmatpush.bf16.msra.mxu0 %v952
    %1303 = vmatpush.bf16.msra.mxu0 %v948
    %1304 = vmatpush.bf16.msra.mxu0 %v944
    %1305 = vmatpush.bf16.msra.mxu0 %v940
    %1306 = vmatmul.bf16.gmra.mxu0 %v277
    %v1307 = vpop.f32.mrf.mxu0
    %v1308 = vadd.f32 %v1295, %v1307
    %v1309 = vpop.f32.mrf.mxu0
    %1310 = vdwg.mxu0
    %1311 = vmatpush.bf16.msra.mxu0 %v1000
    %1312 = vmatpush.bf16.msra.mxu0 %v996
    %1313 = vmatpush.bf16.msra.mxu0 %v992
    %1314 = vmatpush.bf16.msra.mxu0 %v988
    %1315 = vmatpush.bf16.msra.mxu0 %v984
    %1316 = vmatpush.bf16.msra.mxu0 %v980
    %1317 = vmatpush.bf16.msra.mxu0 %v976
    %1318 = vmatpush.bf16.msra.mxu0 %v972
    %1319 = vmatmul.bf16.gmra.mxu0 %v278
    %v1320 = vpop.f32.mrf.mxu0
    %v1321 = vadd.f32 %v1308, %v1320
    %v1322 = vpop.f32.mrf.mxu0
    %1323 = vdwg.mxu0
    %1324 = vmatpush.bf16.msra.mxu0 %v1032
    %1325 = vmatpush.bf16.msra.mxu0 %v1028
    %1326 = vmatpush.bf16.msra.mxu0 %v1024
    %1327 = vmatpush.bf16.msra.mxu0 %v1020
    %1328 = vmatpush.bf16.msra.mxu0 %v1016
    %1329 = vmatpush.bf16.msra.mxu0 %v1012
    %1330 = vmatpush.bf16.msra.mxu0 %v1008
    %1331 = vmatpush.bf16.msra.mxu0 %v1004
    %1332 = vmatmul.bf16.gmra.mxu0 %v279
    %v1333 = vpop.f32.mrf.mxu0
    %v1334 = vadd.f32 %v1321, %v1333
    %v1335 = vpop.f32.mrf.mxu0
    %1336 = vdwg.mxu0
    %1337 = vmatpush.bf16.msra.mxu0 %v1064
    %1338 = vmatpush.bf16.msra.mxu0 %v1060
    %1339 = vmatpush.bf16.msra.mxu0 %v1056
    %1340 = vmatpush.bf16.msra.mxu0 %v1052
    %1341 = vmatpush.bf16.msra.mxu0 %v1048
    %1342 = vmatpush.bf16.msra.mxu0 %v1044
    %1343 = vmatpush.bf16.msra.mxu0 %v1040
    %1344 = vmatpush.bf16.msra.mxu0 %v1036
    %1345 = vmatmul.bf16.gmra.mxu0 %v280
    %v1346 = vpop.f32.mrf.mxu0
    %v1347 = vadd.f32 %v1334, %v1346
    %v1348 = vpop.f32.mrf.mxu0
    %1349 = vdwg.mxu0
    %1350 = vmatpush.bf16.msra.mxu0 0
    %1351 = vmatpush.bf16.msra.mxu0 0
    %1352 = vmatpush.bf16.msra.mxu0 0
    %1353 = vmatpush.bf16.msra.mxu0 0
    %1354 = vmatpush.bf16.msra.mxu0 0
    %1355 = vmatpush.bf16.msra.mxu0 0
    %1356 = vmatpush.bf16.msra.mxu0 0
    %1357 = vmatpush.bf16.msra.mxu0 %v1068
    %1358 = vmatmul.bf16.gmra.mxu0 %v1270
    %v1359 = vpop.f32.mrf.mxu0
    %v1360 = vadd.f32 %v1347, %v1359
    %v1361 = vpop.f32.mrf.mxu0
    %1362 = vdwg.mxu0
    %1363 = vmatpush.bf16.msra.mxu0 %v905
    %1364 = vmatpush.bf16.msra.mxu0 %v901
    %1365 = vmatpush.bf16.msra.mxu0 %v897
    %1366 = vmatpush.bf16.msra.mxu0 %v893
    %1367 = vmatpush.bf16.msra.mxu0 %v889
    %1368 = vmatpush.bf16.msra.mxu0 %v885
    %1369 = vmatpush.bf16.msra.mxu0 %v881
    %1370 = vmatpush.bf16.msra.mxu0 %v877
    %1371 = vmatmul.bf16.gmra.mxu0 %v275
    %v1372 = vpop.f32.mrf.mxu0
    %v1373 = vadd.f32 %v257, %v1372
    %v1374 = vpop.f32.mrf.mxu0
    %1375 = vdwg.mxu0
    %1376 = vmatpush.bf16.msra.mxu0 %v937
    %1377 = vmatpush.bf16.msra.mxu0 %v933
    %1378 = vmatpush.bf16.msra.mxu0 %v929
    %1379 = vmatpush.bf16.msra.mxu0 %v925
    %1380 = vmatpush.bf16.msra.mxu0 %v921
    %1381 = vmatpush.bf16.msra.mxu0 %v917
    %1382 = vmatpush.bf16.msra.mxu0 %v913
    %1383 = vmatpush.bf16.msra.mxu0 %v909
    %1384 = vmatmul.bf16.gmra.mxu0 %v276
    %v1385 = vpop.f32.mrf.mxu0
    %v1386 = vadd.f32 %v1373, %v1385
    %v1387 = vpop.f32.mrf.mxu0
    %1388 = vdwg.mxu0
    %1389 = vmatpush.bf16.msra.mxu0 %v969
    %1390 = vmatpush.bf16.msra.mxu0 %v965
    %1391 = vmatpush.bf16.msra.mxu0 %v961
    %1392 = vmatpush.bf16.msra.mxu0 %v957
    %1393 = vmatpush.bf16.msra.mxu0 %v953
    %1394 = vmatpush.bf16.msra.mxu0 %v949
    %1395 = vmatpush.bf16.msra.mxu0 %v945
    %1396 = vmatpush.bf16.msra.mxu0 %v941
    %1397 = vmatmul.bf16.gmra.mxu0 %v277
    %v1398 = vpop.f32.mrf.mxu0
    %v1399 = vadd.f32 %v1386, %v1398
    %v1400 = vpop.f32.mrf.mxu0
    %1401 = vdwg.mxu0
    %1402 = vmatpush.bf16.msra.mxu0 %v1001
    %1403 = vmatpush.bf16.msra.mxu0 %v997
    %1404 = vmatpush.bf16.msra.mxu0 %v993
    %1405 = vmatpush.bf16.msra.mxu0 %v989
    %1406 = vmatpush.bf16.msra.mxu0 %v985
    %1407 = vmatpush.bf16.msra.mxu0 %v981
    %1408 = vmatpush.bf16.msra.mxu0 %v977
    %1409 = vmatpush.bf16.msra.mxu0 %v973
    %1410 = vmatmul.bf16.gmra.mxu0 %v278
    %v1411 = vpop.f32.mrf.mxu0
    %v1412 = vadd.f32 %v1399, %v1411
    %v1413 = vpop.f32.mrf.mxu0
    %1414 = vdwg.mxu0
    %1415 = vmatpush.bf16.msra.mxu0 %v1033
    %1416 = vmatpush.bf16.msra.mxu0 %v1029
    %1417 = vmatpush.bf16.msra.mxu0 %v1025
    %1418 = vmatpush.bf16.msra.mxu0 %v1021
    %1419 = vmatpush.bf16.msra.mxu0 %v1017
    %1420 = vmatpush.bf16.msra.mxu0 %v1013
    %1421 = vmatpush.bf16.msra.mxu0 %v1009
    %1422 = vmatpush.bf16.msra.mxu0 %v1005
    %1423 = vmatmul.bf16.gmra.mxu0 %v279
    %v1424 = vpop.f32.mrf.mxu0
    %v1425 = vadd.f32 %v1412, %v1424
    %v1426 = vpop.f32.mrf.mxu0
    %1427 = vdwg.mxu0
    %1428 = vmatpush.bf16.msra.mxu0 %v1065
    %1429 = vmatpush.bf16.msra.mxu0 %v1061
    %1430 = vmatpush.bf16.msra.mxu0 %v1057
    %1431 = vmatpush.bf16.msra.mxu0 %v1053
    %1432 = vmatpush.bf16.msra.mxu0 %v1049
    %1433 = vmatpush.bf16.msra.mxu0 %v1045
    %1434 = vmatpush.bf16.msra.mxu0 %v1041
    %1435 = vmatpush.bf16.msra.mxu0 %v1037
    %1436 = vmatmul.bf16.gmra.mxu0 %v280
    %v1437 = vpop.f32.mrf.mxu0
    %v1438 = vadd.f32 %v1425, %v1437
    %v1439 = vpop.f32.mrf.mxu0
    %1440 = vdwg.mxu0
    %1441 = vmatpush.bf16.msra.mxu0 0
    %1442 = vmatpush.bf16.msra.mxu0 0
    %1443 = vmatpush.bf16.msra.mxu0 0
    %1444 = vmatpush.bf16.msra.mxu0 0
    %1445 = vmatpush.bf16.msra.mxu0 0
    %1446 = vmatpush.bf16.msra.mxu0 0
    %1447 = vmatpush.bf16.msra.mxu0 0
    %1448 = vmatpush.bf16.msra.mxu0 %v1069
    %1449 = vmatmul.bf16.gmra.mxu0 %v1270
    %v1450 = vpop.f32.mrf.mxu0
    %v1451 = vadd.f32 %v1438, %v1450
    %v1452 = vpop.f32.mrf.mxu0
    %1453 = vdwg.mxu0
    %1454 = vmatpush.bf16.msra.mxu0 %v906
    %1455 = vmatpush.bf16.msra.mxu0 %v902
    %1456 = vmatpush.bf16.msra.mxu0 %v898
    %1457 = vmatpush.bf16.msra.mxu0 %v894
    %1458 = vmatpush.bf16.msra.mxu0 %v890
    %1459 = vmatpush.bf16.msra.mxu0 %v886
    %1460 = vmatpush.bf16.msra.mxu0 %v882
    %1461 = vmatpush.bf16.msra.mxu0 %v878
    %1462 = vmatmul.bf16.gmra.mxu0 %v275
    %v1463 = vpop.f32.mrf.mxu0
    %v1464 = vadd.f32 %v258, %v1463
    %v1465 = vpop.f32.mrf.mxu0
    %1466 = vdwg.mxu0
    %1467 = vmatpush.bf16.msra.mxu0 %v938
    %1468 = vmatpush.bf16.msra.mxu0 %v934
    %1469 = vmatpush.bf16.msra.mxu0 %v930
    %1470 = vmatpush.bf16.msra.mxu0 %v926
    %1471 = vmatpush.bf16.msra.mxu0 %v922
    %1472 = vmatpush.bf16.msra.mxu0 %v918
    %1473 = vmatpush.bf16.msra.mxu0 %v914
    %1474 = vmatpush.bf16.msra.mxu0 %v910
    %1475 = vmatmul.bf16.gmra.mxu0 %v276
    %v1476 = vpop.f32.mrf.mxu0
    %v1477 = vadd.f32 %v1464, %v1476
    %v1478 = vpop.f32.mrf.mxu0
    %1479 = vdwg.mxu0
    %1480 = vmatpush.bf16.msra.mxu0 %v970
    %1481 = vmatpush.bf16.msra.mxu0 %v966
    %1482 = vmatpush.bf16.msra.mxu0 %v962
    %1483 = vmatpush.bf16.msra.mxu0 %v958
    %1484 = vmatpush.bf16.msra.mxu0 %v954
    %1485 = vmatpush.bf16.msra.mxu0 %v950
    %1486 = vmatpush.bf16.msra.mxu0 %v946
    %1487 = vmatpush.bf16.msra.mxu0 %v942
    %1488 = vmatmul.bf16.gmra.mxu0 %v277
    %v1489 = vpop.f32.mrf.mxu0
    %v1490 = vadd.f32 %v1477, %v1489
    %v1491 = vpop.f32.mrf.mxu0
    %1492 = vdwg.mxu0
    %1493 = vmatpush.bf16.msra.mxu0 %v1002
    %1494 = vmatpush.bf16.msra.mxu0 %v998
    %1495 = vmatpush.bf16.msra.mxu0 %v994
    %1496 = vmatpush.bf16.msra.mxu0 %v990
    %1497 = vmatpush.bf16.msra.mxu0 %v986
    %1498 = vmatpush.bf16.msra.mxu0 %v982
    %1499 = vmatpush.bf16.msra.mxu0 %v978
    %1500 = vmatpush.bf16.msra.mxu0 %v974
    %1501 = vmatmul.bf16.gmra.mxu0 %v278
    %v1502 = vpop.f32.mrf.mxu0
    %v1503 = vadd.f32 %v1490, %v1502
    %v1504 = vpop.f32.mrf.mxu0
    %1505 = vdwg.mxu0
    %1506 = vmatpush.bf16.msra.mxu0 %v1034
    %1507 = vmatpush.bf16.msra.mxu0 %v1030
    %1508 = vmatpush.bf16.msra.mxu0 %v1026
    %1509 = vmatpush.bf16.msra.mxu0 %v1022
    %1510 = vmatpush.bf16.msra.mxu0 %v1018
    %1511 = vmatpush.bf16.msra.mxu0 %v1014
    %1512 = vmatpush.bf16.msra.mxu0 %v1010
    %1513 = vmatpush.bf16.msra.mxu0 %v1006
    %1514 = vmatmul.bf16.gmra.mxu0 %v279
    %v1515 = vpop.f32.mrf.mxu0
    %v1516 = vadd.f32 %v1503, %v1515
    %v1517 = vpop.f32.mrf.mxu0
    %1518 = vdwg.mxu0
    %1519 = vmatpush.bf16.msra.mxu0 %v1066
    %1520 = vmatpush.bf16.msra.mxu0 %v1062
    %1521 = vmatpush.bf16.msra.mxu0 %v1058
    %1522 = vmatpush.bf16.msra.mxu0 %v1054
    %1523 = vmatpush.bf16.msra.mxu0 %v1050
    %1524 = vmatpush.bf16.msra.mxu0 %v1046
    %1525 = vmatpush.bf16.msra.mxu0 %v1042
    %1526 = vmatpush.bf16.msra.mxu0 %v1038
    %1527 = vmatmul.bf16.gmra.mxu0 %v280
    %v1528 = vpop.f32.mrf.mxu0
    %v1529 = vadd.f32 %v1516, %v1528
    %v1530 = vpop.f32.mrf.mxu0
    %1531 = vdwg.mxu0
    %1532 = vmatpush.bf16.msra.mxu0 0
    %1533 = vmatpush.bf16.msra.mxu0 0
    %1534 = vmatpush.bf16.msra.mxu0 0
    %1535 = vmatpush.bf16.msra.mxu0 0
    %1536 = vmatpush.bf16.msra.mxu0 0
    %1537 = vmatpush.bf16.msra.mxu0 0
    %1538 = vmatpush.bf16.msra.mxu0 0
    %1539 = vmatpush.bf16.msra.mxu0 %v1070
    %1540 = vmatmul.bf16.gmra.mxu0 %v1270
    %v1541 = vpop.f32.mrf.mxu0
    %v1542 = vadd.f32 %v1529, %v1541
    %v1543 = vpop.f32.mrf.mxu0
    %1544 = vdwg.mxu0
    %1545 = vmatpush.bf16.msra.mxu0 %v907
    %1546 = vmatpush.bf16.msra.mxu0 %v903
    %1547 = vmatpush.bf16.msra.mxu0 %v899
    %1548 = vmatpush.bf16.msra.mxu0 %v895
    %1549 = vmatpush.bf16.msra.mxu0 %v891
    %1550 = vmatpush.bf16.msra.mxu0 %v887
    %1551 = vmatpush.bf16.msra.mxu0 %v883
    %1552 = vmatpush.bf16.msra.mxu0 %v879
    %1553 = vmatmul.bf16.gmra.mxu0 %v275
    %v1554 = vpop.f32.mrf.mxu0
    %v1555 = vadd.f32 %v259, %v1554
    %v1556 = vpop.f32.mrf.mxu0
    %1557 = vdwg.mxu0
    %1558 = vmatpush.bf16.msra.mxu0 %v939
    %1559 = vmatpush.bf16.msra.mxu0 %v935
    %1560 = vmatpush.bf16.msra.mxu0 %v931
    %1561 = vmatpush.bf16.msra.mxu0 %v927
    %1562 = vmatpush.bf16.msra.mxu0 %v923
    %1563 = vmatpush.bf16.msra.mxu0 %v919
    %1564 = vmatpush.bf16.msra.mxu0 %v915
    %1565 = vmatpush.bf16.msra.mxu0 %v911
    %1566 = vmatmul.bf16.gmra.mxu0 %v276
    %v1567 = vpop.f32.mrf.mxu0
    %v1568 = vadd.f32 %v1555, %v1567
    %v1569 = vpop.f32.mrf.mxu0
    %1570 = vdwg.mxu0
    %1571 = vmatpush.bf16.msra.mxu0 %v971
    %1572 = vmatpush.bf16.msra.mxu0 %v967
    %1573 = vmatpush.bf16.msra.mxu0 %v963
    %1574 = vmatpush.bf16.msra.mxu0 %v959
    %1575 = vmatpush.bf16.msra.mxu0 %v955
    %1576 = vmatpush.bf16.msra.mxu0 %v951
    %1577 = vmatpush.bf16.msra.mxu0 %v947
    %1578 = vmatpush.bf16.msra.mxu0 %v943
    %1579 = vmatmul.bf16.gmra.mxu0 %v277
    %v1580 = vpop.f32.mrf.mxu0
    %v1581 = vadd.f32 %v1568, %v1580
    %v1582 = vpop.f32.mrf.mxu0
    %1583 = vdwg.mxu0
    %1584 = vmatpush.bf16.msra.mxu0 %v1003
    %1585 = vmatpush.bf16.msra.mxu0 %v999
    %1586 = vmatpush.bf16.msra.mxu0 %v995
    %1587 = vmatpush.bf16.msra.mxu0 %v991
    %1588 = vmatpush.bf16.msra.mxu0 %v987
    %1589 = vmatpush.bf16.msra.mxu0 %v983
    %1590 = vmatpush.bf16.msra.mxu0 %v979
    %1591 = vmatpush.bf16.msra.mxu0 %v975
    %1592 = vmatmul.bf16.gmra.mxu0 %v278
    %v1593 = vpop.f32.mrf.mxu0
    %v1594 = vadd.f32 %v1581, %v1593
    %v1595 = vpop.f32.mrf.mxu0
    %1596 = vdwg.mxu0
    %1597 = vmatpush.bf16.msra.mxu0 %v1035
    %1598 = vmatpush.bf16.msra.mxu0 %v1031
    %1599 = vmatpush.bf16.msra.mxu0 %v1027
    %1600 = vmatpush.bf16.msra.mxu0 %v1023
    %1601 = vmatpush.bf16.msra.mxu0 %v1019
    %1602 = vmatpush.bf16.msra.mxu0 %v1015
    %1603 = vmatpush.bf16.msra.mxu0 %v1011
    %1604 = vmatpush.bf16.msra.mxu0 %v1007
    %1605 = vmatmul.bf16.gmra.mxu0 %v279
    %v1606 = vpop.f32.mrf.mxu0
    %v1607 = vadd.f32 %v1594, %v1606
    %v1608 = vpop.f32.mrf.mxu0
    %1609 = vdwg.mxu0
    %1610 = vmatpush.bf16.msra.mxu0 %v1067
    %1611 = vmatpush.bf16.msra.mxu0 %v1063
    %1612 = vmatpush.bf16.msra.mxu0 %v1059
    %1613 = vmatpush.bf16.msra.mxu0 %v1055
    %1614 = vmatpush.bf16.msra.mxu0 %v1051
    %1615 = vmatpush.bf16.msra.mxu0 %v1047
    %1616 = vmatpush.bf16.msra.mxu0 %v1043
    %1617 = vmatpush.bf16.msra.mxu0 %v1039
    %1618 = vmatmul.bf16.gmra.mxu0 %v280
    %v1619 = vpop.f32.mrf.mxu0
    %v1620 = vadd.f32 %v1607, %v1619
    %v1621 = vpop.f32.mrf.mxu0
    %1622 = vdwg.mxu0
    %1623 = vmatpush.bf16.msra.mxu0 0
    %1624 = vmatpush.bf16.msra.mxu0 0
    %1625 = vmatpush.bf16.msra.mxu0 0
    %1626 = vmatpush.bf16.msra.mxu0 0
    %1627 = vmatpush.bf16.msra.mxu0 0
    %1628 = vmatpush.bf16.msra.mxu0 0
    %1629 = vmatpush.bf16.msra.mxu0 0
    %1630 = vmatpush.bf16.msra.mxu0 %v1071
    %1631 = vmatmul.bf16.gmra.mxu0 %v1270
    %v1632 = vpop.f32.mrf.mxu0
    %v1633 = vadd.f32 %v1620, %v1632
    %v1634 = vpop.f32.mrf.mxu0
    %1635 = vdwg.mxu0
    %v1636 = vmax.f32 %v1360, 0.0
    %v1637 = vmax.f32 %v1451, 0.0
    %v1638 = vmax.f32 %v1542, 0.0
    %v1639 = vmax.f32 %v1633, 0.0
    %v1640 = vpack.c.bf16 %v1636, %v1636
    %v1641 = vpack.c.bf16 %v1637, %v1637
    %v1642 = vpack.c.bf16 %v1638, %v1638
    %v1643 = vpack.c.bf16 %v1639, %v1639
    %v1644 = vld [vmem:[#allocation5] sm:$0xf]
    %v1645 = vld [vmem:[#allocation5 + $0x4] sm:$0xf]
    %v1646 = vld [vmem:[#allocation5 + $0x8] sm:$0xf]
    %v1647 = vld [vmem:[#allocation5 + $0xc] sm:$0xf]
    %v1648 = vld [vmem:[#allocation5 + $0x10] sm:$0xf]
    %v1649 = vld [vmem:[#allocation5 + $0x14] sm:$0xf]
    %v1650 = vld [vmem:[#allocation5 + $0x18] sm:$0xf]
    %v1651 = vld [vmem:[#allocation5 + $0x1c] sm:$0xf]
    %v1652 = vld [vmem:[#allocation5 + $0x20] sm:$0xf]
    %v1653 = vld [vmem:[#allocation5 + $0x24] sm:$0xf]
    %v1654 = vld [vmem:[#allocation5 + $0x28] sm:$0xf]
    %v1655 = vld [vmem:[#allocation5 + $0x2c] sm:$0xf]
    %v1656 = vld [vmem:[#allocation5 + $0x30] sm:$0xf]
    %v1657 = vld [vmem:[#allocation5 + $0x34] sm:$0xf]
    %v1658 = vld [vmem:[#allocation5 + $0x38] sm:$0xf]
    %v1659 = vld [vmem:[#allocation5 + $0x3c] sm:$0xf]
    %v1660 = vld [vmem:[#allocation5 + $0x40] sm:$0xf]
    %v1661 = vld [vmem:[#allocation5 + $0x44] sm:$0xf]
    %v1662 = vld [vmem:[#allocation5 + $0x48] sm:$0xf]
    %v1663 = vld [vmem:[#allocation5 + $0x4c] sm:$0xf]
    %v1664 = vld [vmem:[#allocation5 + $0x50] sm:$0xf]
    %v1665 = vld [vmem:[#allocation5 + $0x54] sm:$0xf]
    %v1666 = vld [vmem:[#allocation5 + $0x58] sm:$0xf]
    %v1667 = vld [vmem:[#allocation5 + $0x5c] sm:$0xf]
    %v1668 = vld [vmem:[#allocation5 + $0x60] sm:$0xf]
    %v1669 = vld [vmem:[#allocation5 + $0x64] sm:$0xf]
    %v1670 = vld [vmem:[#allocation5 + $0x68] sm:$0xf]
    %v1671 = vld [vmem:[#allocation5 + $0x6c] sm:$0xf]
    %v1672 = vld [vmem:[#allocation5 + $0x70] sm:$0xf]
    %v1673 = vld [vmem:[#allocation5 + $0x74] sm:$0xf]
    %v1674 = vld [vmem:[#allocation5 + $0x78] sm:$0xf]
    %v1675 = vld [vmem:[#allocation5 + $0x7c] sm:$0xf]
    %v1676 = vld [vmem:[#allocation5 + $0x80] sm:$0xf]
    %v1677 = vld [vmem:[#allocation5 + $0x84] sm:$0xf]
    %v1678 = vld [vmem:[#allocation5 + $0x88] sm:$0xf]
    %v1679 = vld [vmem:[#allocation5 + $0x8c] sm:$0xf]
    %v1680 = vld [vmem:[#allocation5 + $0x90] sm:$0xf]
    %v1681 = vld [vmem:[#allocation5 + $0x94] sm:$0xf]
    %v1682 = vld [vmem:[#allocation5 + $0x98] sm:$0xf]
    %v1683 = vld [vmem:[#allocation5 + $0x9c] sm:$0xf]
    %v1684 = vld [vmem:[#allocation5 + $0xa0] sm:$0xf]
    %v1685 = vld [vmem:[#allocation5 + $0xa4] sm:$0xf]
    %v1686 = vld [vmem:[#allocation5 + $0xa8] sm:$0xf]
    %v1687 = vld [vmem:[#allocation5 + $0xac] sm:$0xf]
    %v1688 = vld [vmem:[#allocation5 + $0xb0] sm:$0xf]
    %v1689 = vld [vmem:[#allocation5 + $0xb4] sm:$0xf]
    %v1690 = vld [vmem:[#allocation5 + $0xb8] sm:$0xf]
    %v1691 = vld [vmem:[#allocation5 + $0xbc] sm:$0xf]
    %v1692 = vld [vmem:[#allocation5 + $0xc0] sm:$0xf]
    %v1693 = vld [vmem:[#allocation5 + $0xc4] sm:$0xf]
    %v1694 = vld [vmem:[#allocation5 + $0xc8] sm:$0xf]
    %v1695 = vld [vmem:[#allocation5 + $0xcc] sm:$0xf]
    %v1696 = vld [vmem:[#allocation5 + $0xd0] sm:$0xf]
    %v1697 = vld [vmem:[#allocation5 + $0xd4] sm:$0xf]
    %v1698 = vld [vmem:[#allocation5 + $0xd8] sm:$0xf]
    %v1699 = vld [vmem:[#allocation5 + $0xdc] sm:$0xf]
    %v1700 = vld [vmem:[#allocation5 + $0xe0] sm:$0xf]
    %v1701 = vld [vmem:[#allocation5 + $0xe4] sm:$0xf]
    %v1702 = vld [vmem:[#allocation5 + $0xe8] sm:$0xf]
    %v1703 = vld [vmem:[#allocation5 + $0xec] sm:$0xf]
    %v1704 = vld [vmem:[#allocation5 + $0xf0] sm:$0xf]
    %v1705 = vld [vmem:[#allocation5 + $0xf4] sm:$0xf]
    %v1706 = vld [vmem:[#allocation5 + $0xf8] sm:$0xf]
    %v1707 = vld [vmem:[#allocation5 + $0xfc] sm:$0xf]
    %v1708 = vld [vmem:[%s4] sm:$0x1]
    %v1710 = vperm.slane %v1708, 0
    %v1776 = vunpack.c.l.b16 %v1644
    %v1777 = vunpack.c.l.b16 %v1645
    %v1778 = vunpack.c.l.b16 %v1646
    %v1779 = vunpack.c.l.b16 %v1647
    %v1780 = vunpack.c.l.b16 %v1648
    %v1781 = vunpack.c.l.b16 %v1649
    %v1782 = vunpack.c.l.b16 %v1650
    %v1783 = vunpack.c.l.b16 %v1651
    %v1784 = vunpack.c.l.b16 %v1652
    %v1785 = vunpack.c.l.b16 %v1653
    %v1786 = vunpack.c.l.b16 %v1654
    %v1787 = vunpack.c.l.b16 %v1655
    %v1788 = vunpack.c.l.b16 %v1656
    %v1789 = vunpack.c.l.b16 %v1657
    %v1790 = vunpack.c.l.b16 %v1658
    %v1791 = vunpack.c.l.b16 %v1659
    %v1792 = vunpack.c.l.b16 %v1660
    %v1793 = vunpack.c.l.b16 %v1661
    %v1794 = vunpack.c.l.b16 %v1662
    %v1795 = vunpack.c.l.b16 %v1663
    %v1796 = vunpack.c.l.b16 %v1664
    %v1797 = vunpack.c.l.b16 %v1665
    %v1798 = vunpack.c.l.b16 %v1666
    %v1799 = vunpack.c.l.b16 %v1667
    %v1800 = vunpack.c.l.b16 %v1668
    %v1801 = vunpack.c.l.b16 %v1669
    %v1802 = vunpack.c.l.b16 %v1670
    %v1803 = vunpack.c.l.b16 %v1671
    %v1804 = vunpack.c.l.b16 %v1672
    %v1805 = vunpack.c.l.b16 %v1673
    %v1806 = vunpack.c.l.b16 %v1674
    %v1807 = vunpack.c.l.b16 %v1675
    %v1808 = vunpack.c.l.b16 %v1676
    %v1809 = vunpack.c.l.b16 %v1677
    %v1810 = vunpack.c.l.b16 %v1678
    %v1811 = vunpack.c.l.b16 %v1679
    %v1812 = vunpack.c.l.b16 %v1680
    %v1813 = vunpack.c.l.b16 %v1681
    %v1814 = vunpack.c.l.b16 %v1682
    %v1815 = vunpack.c.l.b16 %v1683
    %v1816 = vunpack.c.l.b16 %v1684
    %v1817 = vunpack.c.l.b16 %v1685
    %v1818 = vunpack.c.l.b16 %v1686
    %v1819 = vunpack.c.l.b16 %v1687
    %v1820 = vunpack.c.l.b16 %v1688
    %v1821 = vunpack.c.l.b16 %v1689
    %v1822 = vunpack.c.l.b16 %v1690
    %v1823 = vunpack.c.l.b16 %v1691
    %v1824 = vunpack.c.l.b16 %v1692
    %v1825 = vunpack.c.l.b16 %v1693
    %v1826 = vunpack.c.l.b16 %v1694
    %v1827 = vunpack.c.l.b16 %v1695
    %v1828 = vunpack.c.l.b16 %v1696
    %v1829 = vunpack.c.l.b16 %v1697
    %v1830 = vunpack.c.l.b16 %v1698
    %v1831 = vunpack.c.l.b16 %v1699
    %v1832 = vunpack.c.l.b16 %v1700
    %v1833 = vunpack.c.l.b16 %v1701
    %v1834 = vunpack.c.l.b16 %v1702
    %v1835 = vunpack.c.l.b16 %v1703
    %v1836 = vunpack.c.l.b16 %v1704
    %v1837 = vunpack.c.l.b16 %v1705
    %v1838 = vunpack.c.l.b16 %v1706
    %v1839 = vunpack.c.l.b16 %v1707
    %v1840 = vpack.c.b16 %v1777, %v1776
    %v1841 = vpack.c.b16 %v1779, %v1778
    %v1842 = vpack.c.b16 %v1781, %v1780
    %v1843 = vpack.c.b16 %v1783, %v1782
    %v1844 = vpack.c.b16 %v1785, %v1784
    %v1845 = vpack.c.b16 %v1787, %v1786
    %v1846 = vpack.c.b16 %v1789, %v1788
    %v1847 = vpack.c.b16 %v1791, %v1790
    %v1848 = vpack.c.b16 %v1793, %v1792
    %v1849 = vpack.c.b16 %v1795, %v1794
    %v1850 = vpack.c.b16 %v1797, %v1796
    %v1851 = vpack.c.b16 %v1799, %v1798
    %v1852 = vpack.c.b16 %v1801, %v1800
    %v1853 = vpack.c.b16 %v1803, %v1802
    %v1854 = vpack.c.b16 %v1805, %v1804
    %v1855 = vpack.c.b16 %v1807, %v1806
    %v1856 = vpack.c.b16 %v1809, %v1808
    %v1857 = vpack.c.b16 %v1811, %v1810
    %v1858 = vpack.c.b16 %v1813, %v1812
    %v1859 = vpack.c.b16 %v1815, %v1814
    %v1860 = vpack.c.b16 %v1817, %v1816
    %v1861 = vpack.c.b16 %v1819, %v1818
    %v1862 = vpack.c.b16 %v1821, %v1820
    %v1863 = vpack.c.b16 %v1823, %v1822
    %v1864 = vpack.c.b16 %v1825, %v1824
    %v1865 = vpack.c.b16 %v1827, %v1826
    %v1866 = vpack.c.b16 %v1829, %v1828
    %v1867 = vpack.c.b16 %v1831, %v1830
    %v1868 = vpack.c.b16 %v1833, %v1832
    %v1869 = vpack.c.b16 %v1835, %v1834
    %v1870 = vpack.c.b16 %v1837, %v1836
    %v1871 = vpack.c.b16 %v1839, %v1838
    %1904 = vmatpush.bf16.msra.mxu0 %v1847
    %1905 = vmatpush.bf16.msra.mxu0 %v1846
    %1906 = vmatpush.bf16.msra.mxu0 %v1845
    %1907 = vmatpush.bf16.msra.mxu0 %v1844
    %1908 = vmatpush.bf16.msra.mxu0 %v1843
    %1909 = vmatpush.bf16.msra.mxu0 %v1842
    %1910 = vmatpush.bf16.msra.mxu0 %v1841
    %1911 = vmatpush.bf16.msra.mxu0 %v1840
    %1912 = vmatmul.bf16.gmra.mxu0 %v1640
    %v1913 = vpop.f32.mrf.mxu0
    %v1914 = vadd.f32 %v1710, %v1913
    %v1915 = vpop.f32.mrf.mxu0
    %1916 = vdwg.mxu0
    %1917 = vmatpush.bf16.msra.mxu0 %v1855
    %1918 = vmatpush.bf16.msra.mxu0 %v1854
    %1919 = vmatpush.bf16.msra.mxu0 %v1853
    %1920 = vmatpush.bf16.msra.mxu0 %v1852
    %1921 = vmatpush.bf16.msra.mxu0 %v1851
    %1922 = vmatpush.bf16.msra.mxu0 %v1850
    %1923 = vmatpush.bf16.msra.mxu0 %v1849
    %1924 = vmatpush.bf16.msra.mxu0 %v1848
    %1925 = vmatmul.bf16.gmra.mxu0 %v1641
    %v1926 = vpop.f32.mrf.mxu0
    %v1927 = vadd.f32 %v1914, %v1926
    %v1928 = vpop.f32.mrf.mxu0
    %1929 = vdwg.mxu0
    %1930 = vmatpush.bf16.msra.mxu0 %v1863
    %1931 = vmatpush.bf16.msra.mxu0 %v1862
    %1932 = vmatpush.bf16.msra.mxu0 %v1861
    %1933 = vmatpush.bf16.msra.mxu0 %v1860
    %1934 = vmatpush.bf16.msra.mxu0 %v1859
    %1935 = vmatpush.bf16.msra.mxu0 %v1858
    %1936 = vmatpush.bf16.msra.mxu0 %v1857
    %1937 = vmatpush.bf16.msra.mxu0 %v1856
    %1938 = vmatmul.bf16.gmra.mxu0 %v1642
    %v1939 = vpop.f32.mrf.mxu0
    %v1940 = vadd.f32 %v1927, %v1939
    %v1941 = vpop.f32.mrf.mxu0
    %1942 = vdwg.mxu0
    %1943 = vmatpush.bf16.msra.mxu0 %v1871
    %1944 = vmatpush.bf16.msra.mxu0 %v1870
    %1945 = vmatpush.bf16.msra.mxu0 %v1869
    %1946 = vmatpush.bf16.msra.mxu0 %v1868
    %1947 = vmatpush.bf16.msra.mxu0 %v1867
    %1948 = vmatpush.bf16.msra.mxu0 %v1866
    %1949 = vmatpush.bf16.msra.mxu0 %v1865
    %1950 = vmatpush.bf16.msra.mxu0 %v1864
    %1951 = vmatmul.bf16.gmra.mxu0 %v1643
    %v1952 = vpop.f32.mrf.mxu0
    %v1953 = vadd.f32 %v1940, %v1952
    %v1954 = vpop.f32.mrf.mxu0
    %1955 = vdwg.mxu0
    %v1956 = vxor.u32 %v1953, 2147483648
    %v1957 = vmul.f32 %v1956, 1.442695
    %v1958 = vpow.pop %v1957
    %v1959 = vadd.f32 %v1958, 1.0
    %v1960 = vrcp.pop %v1959
    %v1961 = vmul.f32 %v1959, %v1960
    %v1962 = vsub.f32 1.0, %v1961
    %v1963 = vmul.f32 %v1960, %v1962
    %v1964 = vadd.f32 %v1960, %v1963
    %vm1965 = vweird.f32 %v1959
    %vm1966 = vweird.f32 %v1960
    %vm1967 = vmor %vm1965, %vm1966
    %v1968 = vsel %vm1967, %v1960, %v1964
    %v1969 = vand.u32 2147483647, %v1959
    %vm1970 = vcmp.eq.f32.partialorder %v1969, 8.507059e+37
    %v1971 = vand.u32 %v1959, 2147483648
    %v1972 = vor.u32 1.1754944e-38, %v1971
    %v1973 = vsel %vm1970, %v1972, %v1968
    %v1974 = vmul.f32 1.0, %v1973
    %1975 = vst [vmem:[#allocation7] sm:$0xff] %v1974
    // Predicated region
    $region30: #{encoder_forward.1} parent=1 // pred_check
      _
    $region31: #{encoder_forward.1} parent=1 // pred_check_branch
      %1977 = sbr.rel (0) target = $region33
    $region32: #{encoder_forward.1} parent=1 // pred_region
      %1979 = vsyncadd [#allocation4], 0
      %s1981 = sshll.u32 [#allocation7], 4
      %s1982 = int_to_ptr.vmem [resolvable:$true] %s1981
      %s1983 = sshll.u32 %s5, 4
      %s1984 = int_to_ptr.hbm [resolvable:$true] %s1983
      %1986 = dma.vmem_to_hbm [thread:$0]  %s1982, 128, %s1984, [#allocation4]
    $region33: #{encoder_forward.1} parent=1 // pred_fallthru
      _
    // Predicated region
    $region34: #{encoder_forward.1} parent=1 // pred_check
      _
    $region35: #{encoder_forward.1} parent=1 // pred_check_branch
      %1988 = sbr.rel (0) target = $region37
    $region36: #{encoder_forward.1} parent=1 // pred_region
      %1990 = dma.done [#allocation4], 128
    $region37: #{encoder_forward.1} parent=1 // pred_fallthru
      _
    %1991 = vsyncpa [#allocation3], 1
    %1992 = vsyncpa [#allocation6], 1
    %1993 = vsyncpa [#allocation4], 1

</llo_original>
